<compile_context>
chip_gen: v7x
topology: tpu7x:2x2x1
jax: 0.10.0
libtpu: 0.0.40
codegen_flags: <defaults>
</compile_context>

<pallas_src>
import functools

import jax
import jax.numpy as jnp
from jax.experimental import pallas as pl
from jax.experimental.pallas import tpu as pltpu


_UNROLL_MAX = 64  # fully unroll the time loop (straight-line code) up to this length


# ---------------------------------------------------------------------------
# Fused whole-sequence kernel (single invocation, hidden state kept as a carry).
# ---------------------------------------------------------------------------
def _rnn_seq_kernel(idx_ref,        # SMEM (seq_len,) int32 word indices
                    h0_ref,         # VMEM (1, H_pad)      initial hidden
                    tab_ref,        # VMEM (I_pad, H_pad)  per-word additive row (embed folded in)
                    w2t_ref,        # VMEM (H_pad, H_pad)  recurrent weights, pre-transposed
                    bi_ref,         # VMEM (1, H_pad)      i2h bias (embed bias folded in)
                    wot_ref,        # VMEM (H_pad, O_pad)  h2o weights, pre-transposed
                    bo_ref,         # VMEM (1, O_pad)      h2o bias
                    out_ref,        # VMEM (seq_len, O_pad) per-step logits
                    hfin_ref):      # VMEM (1, H_pad)      final hidden
    seq_len = out_ref.shape[0]

    # Load weights once; they stay in vregs / VMEM for the whole sequence.
    w2t = w2t_ref[...]
    wot = wot_ref[...]
    bi = bi_ref[...]
    bo = bo_ref[...]

    def step(t, h):
        # one_hot(word) @ W_in^T  ==  row `idx` of the pre-transposed table.
        pre = (tab_ref[pl.ds(idx_ref[t], 1), :]
               + jnp.dot(h, w2t, preferred_element_type=jnp.float32)
               + bi)
        h_new = jnp.tanh(pre)
        out_ref[pl.ds(t, 1), :] = (
            jnp.dot(h_new, wot, preferred_element_type=jnp.float32) + bo)
        return h_new

    h = h0_ref[...]
    if seq_len <= _UNROLL_MAX:
        for t in range(seq_len):          # trace-time unroll: full LLO visibility
            h = step(t, h)
    else:
        h = jax.lax.fori_loop(0, seq_len, step, h)
    hfin_ref[...] = h


# ---------------------------------------------------------------------------
# Parameter construction (deterministic, PyTorch-like uniform init).
# ---------------------------------------------------------------------------
def _linear_params(key, in_features, out_features):
    kw, kb = jax.random.split(key)
    bound = 1.0 / jnp.sqrt(jnp.float32(in_features))
    w = jax.random.uniform(kw, (out_features, in_features), jnp.float32, -bound, bound)
    b = jax.random.uniform(kb, (out_features,), jnp.float32, -bound, bound)
    return w, b


def init_rnn_params(key, input_size, hidden_size, output_size, embedding_dim=0):
    k_e, k_i, k_o = jax.random.split(key, 3)
    params = {}
    if embedding_dim > 0:
        params["embed_ish"] = _linear_params(k_e, input_size, embedding_dim)
        params["i2h"] = _linear_params(k_i, embedding_dim + hidden_size, hidden_size)
    else:
        params["i2h"] = _linear_params(k_i, input_size + hidden_size, hidden_size)
    params["h2o"] = _linear_params(k_o, hidden_size, output_size)
    return params


# ---------------------------------------------------------------------------
# One-time weight preparation (transpose / split / fold / pad), OUT of hot path.
# ---------------------------------------------------------------------------
def _round_up(n, m):
    return ((n + m - 1) // m) * m


def _pad_to(x, shape):
    return jnp.pad(x, [(0, s - d) for d, s in zip(x.shape, shape)])


def prepare_rnn_params(params, *, input_size, hidden_size, output_size,
                       embedding_dim=0):
    """Pre-transposed, embedding-folded, zero-padded (lane-dense) f32 weights."""
    h_pad = _round_up(hidden_size, 128)
    o_pad = _round_up(output_size, 128)
    i_pad = _round_up(input_size, 8)

    wi, bi = params["i2h"]          # (H, E_or_I + H), (H,)
    wo, bo = params["h2o"]          # (O, H), (O,)
    hi = jax.lax.Precision.HIGHEST  # exact f32 for the one-time fold

    if embedding_dim > 0:
        we, be = params["embed_ish"]                      # (E, I), (E,)
        w1e_t = wi[:, :embedding_dim].T                   # (E, H)
        # one_hot @ We^T @ W1e^T == row of (We^T @ W1e^T); fold be through i2h.
        tab = jnp.dot(we.T, w1e_t, precision=hi)          # (I, H)
        bi_eff = bi + jnp.dot(be, w1e_t, precision=hi)    # (H,)
        split = embedding_dim
    else:
        tab = wi[:, :input_size].T                        # (I, H)
        bi_eff = bi
        split = input_size

    return {
        "tab": _pad_to(tab.astype(jnp.float32), (i_pad, h_pad)),
        "w2t": _pad_to(wi[:, split:].T.astype(jnp.float32), (h_pad, h_pad)),
        "bi":  _pad_to(bi_eff.reshape(1, -1).astype(jnp.float32), (1, h_pad)),
        "wot": _pad_to(wo.T.astype(jnp.float32), (h_pad, o_pad)),
        "bo":  _pad_to(bo.reshape(1, -1).astype(jnp.float32), (1, o_pad)),
    }


# ---------------------------------------------------------------------------
# Fused sequence forward: one pallas_call (no grid) for the whole word sequence.
# ---------------------------------------------------------------------------
@functools.partial(jax.jit, static_argnames=("hidden_size", "output_size"))
def rnn_forward_seq(prepared, word_indices, hidden0, *, hidden_size, output_size):
    """Runs the RNN over `word_indices` (shape (seq_len,)).

    Returns (outputs (seq_len, output_size), final_hidden (1, hidden_size));
    row t of `outputs` equals the module's `output` at timestep t.
    """
    tab, w2t, bi, wot, bo = (prepared["tab"], prepared["w2t"], prepared["bi"],
                             prepared["wot"], prepared["bo"])
    h_pad = w2t.shape[0]
    o_pad = wot.shape[1]
    seq_len = word_indices.shape[0]

    idx = word_indices.astype(jnp.int32)
    h0_pad = jnp.pad(hidden0.astype(jnp.float32),
                     ((0, 0), (0, h_pad - hidden_size)))

    vmem = pl.BlockSpec(memory_space=pltpu.MemorySpace.VMEM)
    smem = pl.BlockSpec(memory_space=pltpu.MemorySpace.SMEM)

    out_pad, hfin_pad = pl.pallas_call(
        _rnn_seq_kernel,
        out_shape=(jax.ShapeDtypeStruct((seq_len, o_pad), jnp.float32),
                   jax.ShapeDtypeStruct((1, h_pad), jnp.float32)),
        in_specs=[smem, vmem, vmem, vmem, vmem, vmem, vmem],
        out_specs=(vmem, vmem),
    )(idx, h0_pad, tab, w2t, bi, wot, bo)

    return out_pad[:, :output_size], hfin_pad[:, :hidden_size]


def rnn_forward(prepared, word_idx, hidden, *, hidden_size, output_size):
    """Single-step forward matching the PyTorch module's forward(input, hidden)."""
    idx = jnp.asarray(word_idx, jnp.int32).reshape((1,))
    outs, h_new = rnn_forward_seq(prepared, idx, hidden,
                                  hidden_size=hidden_size, output_size=output_size)
    return outs, h_new   # outs has shape (1, output_size)


# ---------------------------------------------------------------------------
# Pure-JAX reference (mirrors the PyTorch forward exactly).
# ---------------------------------------------------------------------------
def rnn_step_ref(params, word_idx, hidden, *, input_size, embedding_dim=0):
    embed = jnp.zeros((1, input_size), jnp.float32).at[0, word_idx].set(1.0)
    if embedding_dim > 0:
        we, be = params["embed_ish"]
        embed = embed @ we.T + be
    combined = jnp.concatenate([embed, hidden], axis=1)
    wi, bi = params["i2h"]
    h = jnp.tanh(combined @ wi.T + bi)
    wo, bo = params["h2o"]
    return h @ wo.T + bo, h


def rnn_seq_ref(params, word_indices, hidden0, *, input_size, embedding_dim=0):
    h = hidden0
    outs = []
    for i in range(word_indices.shape[0]):
        o, h = rnn_step_ref(params, int(word_indices[i]), h,
                            input_size=input_size, embedding_dim=embedding_dim)
        outs.append(o)
    return jnp.concatenate(outs, axis=0), h


if __name__ == "__main__":
    key = jax.random.PRNGKey(0)

    input_size, hidden_size, output_size = 16, 32, 10
    seq_len = 8
    k_params, k_idx = jax.random.split(key)
    word_indices = jax.random.randint(k_idx, (seq_len,), 0, input_size,
                                      dtype=jnp.int32)
    hidden0 = jnp.zeros((1, hidden_size), jnp.float32)   # initHidden

    # --- default path: embedding_dim = 0 (one-hot fed straight into i2h) ---
    params = init_rnn_params(k_params, input_size, hidden_size, output_size,
                             embedding_dim=0)
    prepared = prepare_rnn_params(params, input_size=input_size,
                                  hidden_size=hidden_size,
                                  output_size=output_size, embedding_dim=0)

    outs, h_fin = rnn_forward_seq(prepared, word_indices, hidden0,
                                  hidden_size=hidden_size, output_size=output_size)
    jax.block_until_ready((outs, h_fin))

    outs_ref, h_ref = rnn_seq_ref(params, word_indices, hidden0,
                                  input_size=input_size, embedding_dim=0)
    assert jnp.allclose(outs, outs_ref, atol=5e-4), "output mismatch (no-embed, seq)"
    assert jnp.allclose(h_fin, h_ref, atol=5e-4), "hidden mismatch (no-embed, seq)"

    # single-step API (matches module.forward exactly)
    out1, h1 = rnn_forward(prepared, 5, hidden0, hidden_size=hidden_size,
                           output_size=output_size)
    out1_ref, h1_ref = rnn_step_ref(params, 5, hidden0,
                                    input_size=input_size, embedding_dim=0)
    assert jnp.allclose(out1, out1_ref, atol=5e-4), "output mismatch (no-embed, step)"
    assert jnp.allclose(h1, h1_ref, atol=5e-4), "hidden mismatch (no-embed, step)"

    # --- embedding path: embedding_dim > 0 (embedding Linear folded into table) ---
    embedding_dim = 8
    params_e = init_rnn_params(jax.random.PRNGKey(1), input_size, hidden_size,
                               output_size, embedding_dim=embedding_dim)
    prepared_e = prepare_rnn_params(params_e, input_size=input_size,
                                    hidden_size=hidden_size,
                                    output_size=output_size,
                                    embedding_dim=embedding_dim)

    outs_e, h_fin_e = rnn_forward_seq(prepared_e, word_indices, hidden0,
                                      hidden_size=hidden_size,
                                      output_size=output_size)
    jax.block_until_ready((outs_e, h_fin_e))

    outs_e_ref, h_e_ref = rnn_seq_ref(params_e, word_indices, hidden0,
                                      input_size=input_size,
                                      embedding_dim=embedding_dim)
    assert jnp.allclose(outs_e, outs_e_ref, atol=5e-4), "output mismatch (embed, seq)"
    assert jnp.allclose(h_fin_e, h_e_ref, atol=5e-4), "hidden mismatch (embed, seq)"

    print("KERNEL_OK")
</pallas_src>

<mosaic_0001>
module attributes {stable_mosaic.version = 11 : i64} {
  func.func @_rnn_seq_kernel(%arg0: memref<8xi32, #tpu.memory_space<smem>>, %arg1: memref<1x128xf32, #tpu.memory_space<vmem>>, %arg2: memref<16x128xf32, #tpu.memory_space<vmem>>, %arg3: memref<128x128xf32, #tpu.memory_space<vmem>>, %arg4: memref<1x128xf32, #tpu.memory_space<vmem>>, %arg5: memref<128x128xf32, #tpu.memory_space<vmem>>, %arg6: memref<1x128xf32, #tpu.memory_space<vmem>>, %arg7: memref<8x128xf32, #tpu.memory_space<vmem>>, %arg8: memref<1x128xf32, #tpu.memory_space<vmem>>) attributes {dimension_semantics = [], scalar_prefetch = 0 : i64, scratch_operands = 0 : i64, tpu.core_type = #tpu.core_type<tc>} {
    %c0 = arith.constant 0 : index
    %c0_0 = arith.constant 0 : index
    %0 = vector.load %arg3[%c0, %c0_0] : memref<128x128xf32, #tpu.memory_space<vmem>>, vector<128x128xf32>
    %c0_1 = arith.constant 0 : index
    %c0_2 = arith.constant 0 : index
    %1 = vector.load %arg5[%c0_1, %c0_2] : memref<128x128xf32, #tpu.memory_space<vmem>>, vector<128x128xf32>
    %c0_3 = arith.constant 0 : index
    %c0_4 = arith.constant 0 : index
    %2 = vector.load %arg4[%c0_3, %c0_4] : memref<1x128xf32, #tpu.memory_space<vmem>>, vector<1x128xf32>
    %c0_5 = arith.constant 0 : index
    %c0_6 = arith.constant 0 : index
    %3 = vector.load %arg6[%c0_5, %c0_6] : memref<1x128xf32, #tpu.memory_space<vmem>>, vector<1x128xf32>
    %c0_7 = arith.constant 0 : index
    %c0_8 = arith.constant 0 : index
    %4 = vector.load %arg1[%c0_7, %c0_8] : memref<1x128xf32, #tpu.memory_space<vmem>>, vector<1x128xf32>
    %c0_9 = arith.constant 0 : index
    %5 = memref.load %arg0[%c0_9] : memref<8xi32, #tpu.memory_space<smem>>
    %6 = arith.index_cast %5 : i32 to index
    %c0_10 = arith.constant 0 : index
    %7 = vector.load %arg2[%6, %c0_10] : memref<16x128xf32, #tpu.memory_space<vmem>>, vector<1x128xf32>
    %cst = arith.constant dense<0.000000e+00> : vector<1x128xf32>
    %8 = tpu.matmul %4, %0, %cst {dimension_numbers = #tpu.dot_dimension_numbers<[1], [0], [0], [1], [0, 0, 1, 1], [], []>} : vector<1x128xf32>, vector<128x128xf32>, vector<1x128xf32> -> vector<1x128xf32>
    %9 = arith.addf %7, %8 : vector<1x128xf32>
    %10 = arith.addf %9, %2 : vector<1x128xf32>
    %11 = math.tanh %10 : vector<1x128xf32>
    %cst_11 = arith.constant dense<0.000000e+00> : vector<1x128xf32>
    %12 = tpu.matmul %11, %1, %cst_11 {dimension_numbers = #tpu.dot_dimension_numbers<[1], [0], [0], [1], [0, 0, 1, 1], [], []>} : vector<1x128xf32>, vector<128x128xf32>, vector<1x128xf32> -> vector<1x128xf32>
    %13 = arith.addf %12, %3 : vector<1x128xf32>
    %c0_12 = arith.constant 0 : index
    %c0_13 = arith.constant 0 : index
    %14 = vector.load %arg7[%c0_12, %c0_13] : memref<8x128xf32, #tpu.memory_space<vmem>>, vector<1x128xf32>
    tpu.vector_store %arg7[%c0_12, %c0_13], %13 {strides = array<i32>} : memref<8x128xf32, #tpu.memory_space<vmem>>, vector<1x128xf32>,
    %c1 = arith.constant 1 : index
    %15 = memref.load %arg0[%c1] : memref<8xi32, #tpu.memory_space<smem>>
    %16 = arith.index_cast %15 : i32 to index
    %c0_14 = arith.constant 0 : index
    %17 = vector.load %arg2[%16, %c0_14] : memref<16x128xf32, #tpu.memory_space<vmem>>, vector<1x128xf32>
    %cst_15 = arith.constant dense<0.000000e+00> : vector<1x128xf32>
    %18 = tpu.matmul %11, %0, %cst_15 {dimension_numbers = #tpu.dot_dimension_numbers<[1], [0], [0], [1], [0, 0, 1, 1], [], []>} : vector<1x128xf32>, vector<128x128xf32>, vector<1x128xf32> -> vector<1x128xf32>
    %19 = arith.addf %17, %18 : vector<1x128xf32>
    %20 = arith.addf %19, %2 : vector<1x128xf32>
    %21 = math.tanh %20 : vector<1x128xf32>
    %cst_16 = arith.constant dense<0.000000e+00> : vector<1x128xf32>
    %22 = tpu.matmul %21, %1, %cst_16 {dimension_numbers = #tpu.dot_dimension_numbers<[1], [0], [0], [1], [0, 0, 1, 1], [], []>} : vector<1x128xf32>, vector<128x128xf32>, vector<1x128xf32> -> vector<1x128xf32>
    %23 = arith.addf %22, %3 : vector<1x128xf32>
    %c1_17 = arith.constant 1 : index
    %c0_18 = arith.constant 0 : index
    %24 = vector.load %arg7[%c1_17, %c0_18] : memref<8x128xf32, #tpu.memory_space<vmem>>, vector<1x128xf32>
    tpu.vector_store %arg7[%c1_17, %c0_18], %23 {strides = array<i32>} : memref<8x128xf32, #tpu.memory_space<vmem>>, vector<1x128xf32>,
    %c2 = arith.constant 2 : index
    %25 = memref.load %arg0[%c2] : memref<8xi32, #tpu.memory_space<smem>>
    %26 = arith.index_cast %25 : i32 to index
    %c0_19 = arith.constant 0 : index
    %27 = vector.load %arg2[%26, %c0_19] : memref<16x128xf32, #tpu.memory_space<vmem>>, vector<1x128xf32>
    %cst_20 = arith.constant dense<0.000000e+00> : vector<1x128xf32>
    %28 = tpu.matmul %21, %0, %cst_20 {dimension_numbers = #tpu.dot_dimension_numbers<[1], [0], [0], [1], [0, 0, 1, 1], [], []>} : vector<1x128xf32>, vector<128x128xf32>, vector<1x128xf32> -> vector<1x128xf32>
    %29 = arith.addf %27, %28 : vector<1x128xf32>
    %30 = arith.addf %29, %2 : vector<1x128xf32>
    %31 = math.tanh %30 : vector<1x128xf32>
    %cst_21 = arith.constant dense<0.000000e+00> : vector<1x128xf32>
    %32 = tpu.matmul %31, %1, %cst_21 {dimension_numbers = #tpu.dot_dimension_numbers<[1], [0], [0], [1], [0, 0, 1, 1], [], []>} : vector<1x128xf32>, vector<128x128xf32>, vector<1x128xf32> -> vector<1x128xf32>
    %33 = arith.addf %32, %3 : vector<1x128xf32>
    %c2_22 = arith.constant 2 : index
    %c0_23 = arith.constant 0 : index
    %34 = vector.load %arg7[%c2_22, %c0_23] : memref<8x128xf32, #tpu.memory_space<vmem>>, vector<1x128xf32>
    tpu.vector_store %arg7[%c2_22, %c0_23], %33 {strides = array<i32>} : memref<8x128xf32, #tpu.memory_space<vmem>>, vector<1x128xf32>,
    %c3 = arith.constant 3 : index
    %35 = memref.load %arg0[%c3] : memref<8xi32, #tpu.memory_space<smem>>
    %36 = arith.index_cast %35 : i32 to index
    %c0_24 = arith.constant 0 : index
    %37 = vector.load %arg2[%36, %c0_24] : memref<16x128xf32, #tpu.memory_space<vmem>>, vector<1x128xf32>
    %cst_25 = arith.constant dense<0.000000e+00> : vector<1x128xf32>
    %38 = tpu.matmul %31, %0, %cst_25 {dimension_numbers = #tpu.dot_dimension_numbers<[1], [0], [0], [1], [0, 0, 1, 1], [], []>} : vector<1x128xf32>, vector<128x128xf32>, vector<1x128xf32> -> vector<1x128xf32>
    %39 = arith.addf %37, %38 : vector<1x128xf32>
    %40 = arith.addf %39, %2 : vector<1x128xf32>
    %41 = math.tanh %40 : vector<1x128xf32>
    %cst_26 = arith.constant dense<0.000000e+00> : vector<1x128xf32>
    %42 = tpu.matmul %41, %1, %cst_26 {dimension_numbers = #tpu.dot_dimension_numbers<[1], [0], [0], [1], [0, 0, 1, 1], [], []>} : vector<1x128xf32>, vector<128x128xf32>, vector<1x128xf32> -> vector<1x128xf32>
    %43 = arith.addf %42, %3 : vector<1x128xf32>
    %c3_27 = arith.constant 3 : index
    %c0_28 = arith.constant 0 : index
    %44 = vector.load %arg7[%c3_27, %c0_28] : memref<8x128xf32, #tpu.memory_space<vmem>>, vector<1x128xf32>
    tpu.vector_store %arg7[%c3_27, %c0_28], %43 {strides = array<i32>} : memref<8x128xf32, #tpu.memory_space<vmem>>, vector<1x128xf32>,
    %c4 = arith.constant 4 : index
    %45 = memref.load %arg0[%c4] : memref<8xi32, #tpu.memory_space<smem>>
    %46 = arith.index_cast %45 : i32 to index
    %c0_29 = arith.constant 0 : index
    %47 = vector.load %arg2[%46, %c0_29] : memref<16x128xf32, #tpu.memory_space<vmem>>, vector<1x128xf32>
    %cst_30 = arith.constant dense<0.000000e+00> : vector<1x128xf32>
    %48 = tpu.matmul %41, %0, %cst_30 {dimension_numbers = #tpu.dot_dimension_numbers<[1], [0], [0], [1], [0, 0, 1, 1], [], []>} : vector<1x128xf32>, vector<128x128xf32>, vector<1x128xf32> -> vector<1x128xf32>
    %49 = arith.addf %47, %48 : vector<1x128xf32>
    %50 = arith.addf %49, %2 : vector<1x128xf32>
    %51 = math.tanh %50 : vector<1x128xf32>
    %cst_31 = arith.constant dense<0.000000e+00> : vector<1x128xf32>
    %52 = tpu.matmul %51, %1, %cst_31 {dimension_numbers = #tpu.dot_dimension_numbers<[1], [0], [0], [1], [0, 0, 1, 1], [], []>} : vector<1x128xf32>, vector<128x128xf32>, vector<1x128xf32> -> vector<1x128xf32>
    %53 = arith.addf %52, %3 : vector<1x128xf32>
    %c4_32 = arith.constant 4 : index
    %c0_33 = arith.constant 0 : index
    %54 = vector.load %arg7[%c4_32, %c0_33] : memref<8x128xf32, #tpu.memory_space<vmem>>, vector<1x128xf32>
    tpu.vector_store %arg7[%c4_32, %c0_33], %53 {strides = array<i32>} : memref<8x128xf32, #tpu.memory_space<vmem>>, vector<1x128xf32>,
    %c5 = arith.constant 5 : index
    %55 = memref.load %arg0[%c5] : memref<8xi32, #tpu.memory_space<smem>>
    %56 = arith.index_cast %55 : i32 to index
    %c0_34 = arith.constant 0 : index
    %57 = vector.load %arg2[%56, %c0_34] : memref<16x128xf32, #tpu.memory_space<vmem>>, vector<1x128xf32>
    %cst_35 = arith.constant dense<0.000000e+00> : vector<1x128xf32>
    %58 = tpu.matmul %51, %0, %cst_35 {dimension_numbers = #tpu.dot_dimension_numbers<[1], [0], [0], [1], [0, 0, 1, 1], [], []>} : vector<1x128xf32>, vector<128x128xf32>, vector<1x128xf32> -> vector<1x128xf32>
    %59 = arith.addf %57, %58 : vector<1x128xf32>
    %60 = arith.addf %59, %2 : vector<1x128xf32>
    %61 = math.tanh %60 : vector<1x128xf32>
    %cst_36 = arith.constant dense<0.000000e+00> : vector<1x128xf32>
    %62 = tpu.matmul %61, %1, %cst_36 {dimension_numbers = #tpu.dot_dimension_numbers<[1], [0], [0], [1], [0, 0, 1, 1], [], []>} : vector<1x128xf32>, vector<128x128xf32>, vector<1x128xf32> -> vector<1x128xf32>
    %63 = arith.addf %62, %3 : vector<1x128xf32>
    %c5_37 = arith.constant 5 : index
    %c0_38 = arith.constant 0 : index
    %64 = vector.load %arg7[%c5_37, %c0_38] : memref<8x128xf32, #tpu.memory_space<vmem>>, vector<1x128xf32>
    tpu.vector_store %arg7[%c5_37, %c0_38], %63 {strides = array<i32>} : memref<8x128xf32, #tpu.memory_space<vmem>>, vector<1x128xf32>,
    %c6 = arith.constant 6 : index
    %65 = memref.load %arg0[%c6] : memref<8xi32, #tpu.memory_space<smem>>
    %66 = arith.index_cast %65 : i32 to index
    %c0_39 = arith.constant 0 : index
    %67 = vector.load %arg2[%66, %c0_39] : memref<16x128xf32, #tpu.memory_space<vmem>>, vector<1x128xf32>
    %cst_40 = arith.constant dense<0.000000e+00> : vector<1x128xf32>
    %68 = tpu.matmul %61, %0, %cst_40 {dimension_numbers = #tpu.dot_dimension_numbers<[1], [0], [0], [1], [0, 0, 1, 1], [], []>} : vector<1x128xf32>, vector<128x128xf32>, vector<1x128xf32> -> vector<1x128xf32>
    %69 = arith.addf %67, %68 : vector<1x128xf32>
    %70 = arith.addf %69, %2 : vector<1x128xf32>
    %71 = math.tanh %70 : vector<1x128xf32>
    %cst_41 = arith.constant dense<0.000000e+00> : vector<1x128xf32>
    %72 = tpu.matmul %71, %1, %cst_41 {dimension_numbers = #tpu.dot_dimension_numbers<[1], [0], [0], [1], [0, 0, 1, 1], [], []>} : vector<1x128xf32>, vector<128x128xf32>, vector<1x128xf32> -> vector<1x128xf32>
    %73 = arith.addf %72, %3 : vector<1x128xf32>
    %c6_42 = arith.constant 6 : index
    %c0_43 = arith.constant 0 : index
    %74 = vector.load %arg7[%c6_42, %c0_43] : memref<8x128xf32, #tpu.memory_space<vmem>>, vector<1x128xf32>
    tpu.vector_store %arg7[%c6_42, %c0_43], %73 {strides = array<i32>} : memref<8x128xf32, #tpu.memory_space<vmem>>, vector<1x128xf32>,
    %c7 = arith.constant 7 : index
    %75 = memref.load %arg0[%c7] : memref<8xi32, #tpu.memory_space<smem>>
    %76 = arith.index_cast %75 : i32 to index
    %c0_44 = arith.constant 0 : index
    %77 = vector.load %arg2[%76, %c0_44] : memref<16x128xf32, #tpu.memory_space<vmem>>, vector<1x128xf32>
    %cst_45 = arith.constant dense<0.000000e+00> : vector<1x128xf32>
    %78 = tpu.matmul %71, %0, %cst_45 {dimension_numbers = #tpu.dot_dimension_numbers<[1], [0], [0], [1], [0, 0, 1, 1], [], []>} : vector<1x128xf32>, vector<128x128xf32>, vector<1x128xf32> -> vector<1x128xf32>
    %79 = arith.addf %77, %78 : vector<1x128xf32>
    %80 = arith.addf %79, %2 : vector<1x128xf32>
    %81 = math.tanh %80 : vector<1x128xf32>
    %cst_46 = arith.constant dense<0.000000e+00> : vector<1x128xf32>
    %82 = tpu.matmul %81, %1, %cst_46 {dimension_numbers = #tpu.dot_dimension_numbers<[1], [0], [0], [1], [0, 0, 1, 1], [], []>} : vector<1x128xf32>, vector<128x128xf32>, vector<1x128xf32> -> vector<1x128xf32>
    %83 = arith.addf %82, %3 : vector<1x128xf32>
    %c7_47 = arith.constant 7 : index
    %c0_48 = arith.constant 0 : index
    %84 = vector.load %arg7[%c7_47, %c0_48] : memref<8x128xf32, #tpu.memory_space<vmem>>, vector<1x128xf32>
    tpu.vector_store %arg7[%c7_47, %c0_48], %83 {strides = array<i32>} : memref<8x128xf32, #tpu.memory_space<vmem>>, vector<1x128xf32>,
    %c0_49 = arith.constant 0 : index
    %c0_50 = arith.constant 0 : index
    %85 = vector.load %arg8[%c0_49, %c0_50] : memref<1x128xf32, #tpu.memory_space<vmem>>, vector<1x128xf32>
    tpu.vector_store %arg8[%c0_49, %c0_50], %81 {strides = array<i32>} : memref<1x128xf32, #tpu.memory_space<vmem>>, vector<1x128xf32>,
    return
  }
}

</mosaic_0001>

<llo_original>
// kernel: rnn_forward_seq.1
$region0: #{rnn_forward_seq.1}
  #allocation0 [shape = 'u32[]', space=smem, size = 0x4, offset = 0x4, fixed_abs, tag = 'smem constant byte address 0x4 - core index']
  #allocation1 [shape = 'u32[144,128]{1,0:T(1,128)}', space=vmem, size = 0x12000, scoped, tag = 'internal scratch']
  %s0 = inlined_call_operand.vmem [shape: s32[8], index: 0, kind: input, shape index: {}]
  %s1 = inlined_call_operand.vmem [shape: f32[1,128], index: 1, kind: input, shape index: {}]
  %s2 = inlined_call_operand.hbm [shape: f32[16,128], index: 2, kind: input, shape index: {}]
  %s3 = inlined_call_operand.hbm [shape: f32[128,128], index: 3, kind: input, shape index: {}]
  %s4 = inlined_call_operand.vmem [shape: f32[1,128], index: 4, kind: input, shape index: {}]
  %s5 = inlined_call_operand.hbm [shape: f32[128,128], index: 5, kind: input, shape index: {}]
  %s6 = inlined_call_operand.vmem [shape: f32[1,128], index: 6, kind: input, shape index: {}]
  %s7 = inlined_call_operand.hbm [shape: f32[8,128], index: 7, kind: output, shape index: {0}]
  %s8 = inlined_call_operand.hbm [shape: f32[1,128], index: 8, kind: output, shape index: {1}]
  %9 = xla_tuple %s7, %s8
  %s10 = sld [smem:[#allocation0]]
  $region62: #{rnn_forward_seq.1} parent=0
    _
  %s12 = ssub.s32 1, %s10
  %s13 = scalar_select 0, %s12, %s10
  $region1: #{rnn_forward_seq.1} parent=0
    #allocation2 [shape = 'u8[512]{0}', space=smem, size = 0x200, scoped, tag = 'input window, operand 0, single buffered']
    #allocation3 [shape = 's32[1]{0}', space=sflag, size = 0x4, scoped, tag = 'scoped memory for rnn_forward_seq.1']
    #allocation4 [shape = 's32[1]{0}', space=sflag, size = 0x4, scoped, tag = 'scoped memory for rnn_forward_seq.1']
    #allocation5 [shape = 's32[1]{0}', space=sflag, size = 0x4, scoped, tag = 'scoped memory for rnn_forward_seq.1']
    #allocation6 [shape = 'u8[8192]{0}', space=vmem, size = 0x2000, scoped, tag = 'input window, operand 2, single buffered']
    #allocation7 [shape = 'u8[65536]{0}', space=vmem, size = 0x10000, scoped, tag = 'input window, operand 3, single buffered']
    #allocation8 [shape = 's32[1]{0}', space=sflag, size = 0x4, scoped, tag = 'scoped memory for rnn_forward_seq.1']
    #allocation9 [shape = 'u8[65536]{0}', space=vmem, size = 0x10000, scoped, tag = 'input window, operand 5, single buffered']
    #allocation10 [shape = 'u8[4096]{0}', space=vmem, size = 0x1000, scoped, tag = 'output window, operand 0, single buffered']
    #allocation11 [shape = 'u8[512]{0}', space=vmem, size = 0x400, scoped, tag = 'output window, operand 1, single buffered']
    #allocation12 [shape = 's32[1]{0}', space=sflag, size = 0x4, scoped, tag = 'scoped memory for rnn_forward_seq.1']
    %14 = vsyncpa [#allocation5], 0
    %15 = vsyncpa [#allocation3], 0
    %16 = vsyncpa [#allocation8], 0
    %17 = vsyncpa [#allocation4], 0
    %18 = vsyncpa [#allocation12], 0
    // Predicated region
    $region2: #{rnn_forward_seq.1} parent=1 // pred_check
      _
    $region3: #{rnn_forward_seq.1} parent=1 // pred_check_branch
      %20 = sbr.rel (0) target = $region5
    $region4: #{rnn_forward_seq.1} parent=1 // pred_region
      %s22 = ssub.s32 16, 16
      %23 = vsyncadd [#allocation5], %s22
      %s25 = sshll.u32 %s0, 4
      %s26 = int_to_ptr.vmem [resolvable:$true] %s25
      %28 = dma.vmem_to_smem %s26, 16, [#allocation2], [#allocation5]
    $region5: #{rnn_forward_seq.1} parent=1 // pred_fallthru
      _
    // Predicated region
    $region6: #{rnn_forward_seq.1} parent=1 // pred_check
      _
    $region7: #{rnn_forward_seq.1} parent=1 // pred_check_branch
      %30 = sbr.rel (0) target = $region9
    $region8: #{rnn_forward_seq.1} parent=1 // pred_region
      _
    $region9: #{rnn_forward_seq.1} parent=1 // pred_fallthru
      _
    // Predicated region
    $region10: #{rnn_forward_seq.1} parent=1 // pred_check
      _
    $region11: #{rnn_forward_seq.1} parent=1 // pred_check_branch
      %32 = sbr.rel (0) target = $region13
    $region12: #{rnn_forward_seq.1} parent=1 // pred_region
      %s34 = ssub.s32 256, 256
      %35 = vsyncadd [#allocation3], %s34
      %s36 = sshll.u32 [#allocation6], 4
      %s37 = int_to_ptr.vmem [resolvable:$true] %s36
      %42 = dma.hbm_to_vmem [thread:$0]  %s2, 256, %s37, [#allocation3], 128, 128, 8
    $region13: #{rnn_forward_seq.1} parent=1 // pred_fallthru
      _
    // Predicated region
    $region14: #{rnn_forward_seq.1} parent=1 // pred_check
      _
    $region15: #{rnn_forward_seq.1} parent=1 // pred_check_branch
      %44 = sbr.rel (0) target = $region17
    $region16: #{rnn_forward_seq.1} parent=1 // pred_region
      %s46 = ssub.s32 2048, 2048
      %47 = vsyncadd [#allocation8], %s46
      %s48 = sshll.u32 [#allocation7], 4
      %s49 = int_to_ptr.vmem [resolvable:$true] %s48
      %54 = dma.hbm_to_vmem [thread:$0]  %s3, 2048, %s49, [#allocation8], 128, 128, 8
    $region17: #{rnn_forward_seq.1} parent=1 // pred_fallthru
      _
    // Predicated region
    $region18: #{rnn_forward_seq.1} parent=1 // pred_check
      _
    $region19: #{rnn_forward_seq.1} parent=1 // pred_check_branch
      %56 = sbr.rel (0) target = $region21
    $region20: #{rnn_forward_seq.1} parent=1 // pred_region
      _
    $region21: #{rnn_forward_seq.1} parent=1 // pred_fallthru
      _
    // Predicated region
    $region22: #{rnn_forward_seq.1} parent=1 // pred_check
      _
    $region23: #{rnn_forward_seq.1} parent=1 // pred_check_branch
      %58 = sbr.rel (0) target = $region25
    $region24: #{rnn_forward_seq.1} parent=1 // pred_region
      %s60 = ssub.s32 2048, 2048
      %61 = vsyncadd [#allocation8], %s60
      %s62 = sshll.u32 [#allocation9], 4
      %s63 = int_to_ptr.vmem [resolvable:$true] %s62
      %68 = dma.hbm_to_vmem [thread:$0]  %s5, 2048, %s63, [#allocation8], 128, 128, 8
    $region25: #{rnn_forward_seq.1} parent=1 // pred_fallthru
      _
    // Predicated region
    $region26: #{rnn_forward_seq.1} parent=1 // pred_check
      _
    $region27: #{rnn_forward_seq.1} parent=1 // pred_check_branch
      %70 = sbr.rel (0) target = $region29
    $region28: #{rnn_forward_seq.1} parent=1 // pred_region
      _
    $region29: #{rnn_forward_seq.1} parent=1 // pred_fallthru
      _
    // Predicated region
    $region30: #{rnn_forward_seq.1} parent=1 // pred_check
      _
    $region31: #{rnn_forward_seq.1} parent=1 // pred_check_branch
      %72 = sbr.rel (0) target = $region33
    $region32: #{rnn_forward_seq.1} parent=1 // pred_region
      %73 = dma.done [#allocation5], 16
    $region33: #{rnn_forward_seq.1} parent=1 // pred_fallthru
      _
    // Predicated region
    $region34: #{rnn_forward_seq.1} parent=1 // pred_check
      _
    $region35: #{rnn_forward_seq.1} parent=1 // pred_check_branch
      %75 = sbr.rel (0) target = $region37
    $region36: #{rnn_forward_seq.1} parent=1 // pred_region
      %76 = dma.done [#allocation3], 256
    $region37: #{rnn_forward_seq.1} parent=1 // pred_fallthru
      _
    // Predicated region
    $region38: #{rnn_forward_seq.1} parent=1 // pred_check
      _
    $region39: #{rnn_forward_seq.1} parent=1 // pred_check_branch
      %78 = sbr.rel (0) target = $region41
    $region40: #{rnn_forward_seq.1} parent=1 // pred_region
      %79 = dma.done [#allocation8], 2048
    $region41: #{rnn_forward_seq.1} parent=1 // pred_fallthru
      _
    // Predicated region
    $region42: #{rnn_forward_seq.1} parent=1 // pred_check
      _
    $region43: #{rnn_forward_seq.1} parent=1 // pred_check_branch
      %81 = sbr.rel (0) target = $region45
    $region44: #{rnn_forward_seq.1} parent=1 // pred_region
      %82 = dma.done [#allocation8], 2048
    $region45: #{rnn_forward_seq.1} parent=1 // pred_fallthru
      _
    %83 = sfence
    %v84 = vld [vmem:[#allocation7] sm:$0xff]
    %v85 = vld [vmem:[#allocation7 + $0x8] sm:$0xff]
    %v86 = vld [vmem:[#allocation7 + $0x10] sm:$0xff]
    %v87 = vld [vmem:[#allocation7 + $0x18] sm:$0xff]
    %v88 = vld [vmem:[#allocation7 + $0x20] sm:$0xff]
    %v89 = vld [vmem:[#allocation7 + $0x28] sm:$0xff]
    %v90 = vld [vmem:[#allocation7 + $0x30] sm:$0xff]
    %v91 = vld [vmem:[#allocation7 + $0x38] sm:$0xff]
    %v92 = vld [vmem:[#allocation7 + $0x40] sm:$0xff]
    %v93 = vld [vmem:[#allocation7 + $0x48] sm:$0xff]
    %v94 = vld [vmem:[#allocation7 + $0x50] sm:$0xff]
    %v95 = vld [vmem:[#allocation7 + $0x58] sm:$0xff]
    %v96 = vld [vmem:[#allocation7 + $0x60] sm:$0xff]
    %v97 = vld [vmem:[#allocation7 + $0x68] sm:$0xff]
    %v98 = vld [vmem:[#allocation7 + $0x70] sm:$0xff]
    %v99 = vld [vmem:[#allocation7 + $0x78] sm:$0xff]
    %v100 = vld [vmem:[#allocation9] sm:$0xff]
    %v101 = vld [vmem:[#allocation9 + $0x8] sm:$0xff]
    %v102 = vld [vmem:[#allocation9 + $0x10] sm:$0xff]
    %v103 = vld [vmem:[#allocation9 + $0x18] sm:$0xff]
    %v104 = vld [vmem:[#allocation9 + $0x20] sm:$0xff]
    %v105 = vld [vmem:[#allocation9 + $0x28] sm:$0xff]
    %v106 = vld [vmem:[#allocation9 + $0x30] sm:$0xff]
    %v107 = vld [vmem:[#allocation9 + $0x38] sm:$0xff]
    %v108 = vld [vmem:[#allocation9 + $0x40] sm:$0xff]
    %v109 = vld [vmem:[#allocation9 + $0x48] sm:$0xff]
    %v110 = vld [vmem:[#allocation9 + $0x50] sm:$0xff]
    %v111 = vld [vmem:[#allocation9 + $0x58] sm:$0xff]
    %v112 = vld [vmem:[#allocation9 + $0x60] sm:$0xff]
    %v113 = vld [vmem:[#allocation9 + $0x68] sm:$0xff]
    %v114 = vld [vmem:[#allocation9 + $0x70] sm:$0xff]
    %v115 = vld [vmem:[#allocation9 + $0x78] sm:$0xff]
    %v116 = vld [vmem:[%s4] sm:$0x1]
    %v117 = vld [vmem:[%s6] sm:$0x1]
    %v118 = vld [vmem:[%s1] sm:$0x1]
    %s119 = sld [smem:[#allocation2]]
    %s120 = scalar_lea.vmem [#allocation6], %s119
    %v121 = vld [vmem:[%s120] sm:$0x1]
    %122 = vmatprep.subr.mxu0 0.0
    %123 = vmatpush1.msra.mxu0 %v84
    %124 = vmatprep.subr.mxu0 0.0
    %125 = vmatpush1.msra.mxu0 %v85
    %126 = vmatprep.subr.mxu0 0.0
    %127 = vmatpush1.msra.mxu0 %v86
    %128 = vmatprep.subr.mxu0 0.0
    %129 = vmatpush1.msra.mxu0 %v87
    %130 = vmatprep.subr.mxu0 0.0
    %131 = vmatpush1.msra.mxu0 %v88
    %132 = vmatprep.subr.mxu0 0.0
    %133 = vmatpush1.msra.mxu0 %v89
    %134 = vmatprep.subr.mxu0 0.0
    %135 = vmatpush1.msra.mxu0 %v90
    %136 = vmatprep.subr.mxu0 0.0
    %137 = vmatpush1.msra.mxu0 %v91
    %138 = vmatprep.subr.mxu0 0.0
    %139 = vmatpush1.msra.mxu0 %v92
    %140 = vmatprep.subr.mxu0 0.0
    %141 = vmatpush1.msra.mxu0 %v93
    %142 = vmatprep.subr.mxu0 0.0
    %143 = vmatpush1.msra.mxu0 %v94
    %144 = vmatprep.subr.mxu0 0.0
    %145 = vmatpush1.msra.mxu0 %v95
    %146 = vmatprep.subr.mxu0 0.0
    %147 = vmatpush1.msra.mxu0 %v96
    %148 = vmatprep.subr.mxu0 0.0
    %149 = vmatpush1.msra.mxu0 %v97
    %150 = vmatprep.subr.mxu0 0.0
    %151 = vmatpush1.msra.mxu0 %v98
    %152 = vmatprep.subr.mxu0 0.0
    %153 = vmatpush1.msra.mxu0 %v99
    %154 = vmatprep.subr.mxu0 0.0
    %155 = vmatpush1.msra.mxu0 0.0
    %156 = vmatprep.subr.mxu0 0.0
    %157 = vmatpush1.msra.mxu0 0.0
    %158 = vmatprep.subr.mxu0 0.0
    %159 = vmatpush1.msra.mxu0 0.0
    %160 = vmatprep.subr.mxu0 0.0
    %161 = vmatpush1.msra.mxu0 0.0
    %162 = vmatprep.subr.mxu0 0.0
    %163 = vmatpush1.msra.mxu0 0.0
    %164 = vmatprep.subr.mxu0 0.0
    %165 = vmatpush1.msra.mxu0 0.0
    %166 = vmatprep.subr.mxu0 0.0
    %167 = vmatpush1.msra.mxu0 0.0
    %168 = vmatprep.subr.mxu0 0.0
    %169 = vmatpush1.msra.mxu0 0.0
    %170 = vmatprep.subr.mxu0 0.0
    %171 = vmatpush1.msra.mxu0 0.0
    %172 = vmatprep.subr.mxu0 0.0
    %173 = vmatpush1.msra.mxu0 0.0
    %174 = vmatprep.subr.mxu0 0.0
    %175 = vmatpush1.msra.mxu0 0.0
    %176 = vmatprep.subr.mxu0 0.0
    %177 = vmatpush1.msra.mxu0 0.0
    %178 = vmatprep.subr.mxu0 0.0
    %179 = vmatpush1.msra.mxu0 0.0
    %180 = vmatprep.subr.mxu0 0.0
    %181 = vmatpush1.msra.mxu0 0.0
    %182 = vmatprep.subr.mxu0 0.0
    %183 = vmatpush1.msra.mxu0 0.0
    %184 = vmatprep.subr.mxu0 0.0
    %185 = vmatpush1.msra.mxu0 0.0
    %186 = vmatprep.mubr.f32.mxu0 0.0
    %187 = vmatmul.mubr.f32.gmra.mrb[0].mxu0 %v118
    %v188 = vpop.f32.mrb[0].mxu0
    %v189 = vadd.f32 0.0, %v188
    %v190 = vpop.f32.mrb[0].mxu0
    %191 = vdwg.mxu0
    %v192 = vadd.f32 %v121, %v189
    %v193 = vadd.f32 %v192, %v116
    %v194 = vtanh.pop %v193
    %195 = vmatprep.subr.mxu0 0.0
    %196 = vmatpush1.msra.mxu0 %v100
    %197 = vmatprep.subr.mxu0 0.0
    %198 = vmatpush1.msra.mxu0 %v101
    %199 = vmatprep.subr.mxu0 0.0
    %200 = vmatpush1.msra.mxu0 %v102
    %201 = vmatprep.subr.mxu0 0.0
    %202 = vmatpush1.msra.mxu0 %v103
    %203 = vmatprep.subr.mxu0 0.0
    %204 = vmatpush1.msra.mxu0 %v104
    %205 = vmatprep.subr.mxu0 0.0
    %206 = vmatpush1.msra.mxu0 %v105
    %207 = vmatprep.subr.mxu0 0.0
    %208 = vmatpush1.msra.mxu0 %v106
    %209 = vmatprep.subr.mxu0 0.0
    %210 = vmatpush1.msra.mxu0 %v107
    %211 = vmatprep.subr.mxu0 0.0
    %212 = vmatpush1.msra.mxu0 %v108
    %213 = vmatprep.subr.mxu0 0.0
    %214 = vmatpush1.msra.mxu0 %v109
    %215 = vmatprep.subr.mxu0 0.0
    %216 = vmatpush1.msra.mxu0 %v110
    %217 = vmatprep.subr.mxu0 0.0
    %218 = vmatpush1.msra.mxu0 %v111
    %219 = vmatprep.subr.mxu0 0.0
    %220 = vmatpush1.msra.mxu0 %v112
    %221 = vmatprep.subr.mxu0 0.0
    %222 = vmatpush1.msra.mxu0 %v113
    %223 = vmatprep.subr.mxu0 0.0
    %224 = vmatpush1.msra.mxu0 %v114
    %225 = vmatprep.subr.mxu0 0.0
    %226 = vmatpush1.msra.mxu0 %v115
    %227 = vmatprep.subr.mxu0 0.0
    %228 = vmatpush1.msra.mxu0 0.0
    %229 = vmatprep.subr.mxu0 0.0
    %230 = vmatpush1.msra.mxu0 0.0
    %231 = vmatprep.subr.mxu0 0.0
    %232 = vmatpush1.msra.mxu0 0.0
    %233 = vmatprep.subr.mxu0 0.0
    %234 = vmatpush1.msra.mxu0 0.0
    %235 = vmatprep.subr.mxu0 0.0
    %236 = vmatpush1.msra.mxu0 0.0
    %237 = vmatprep.subr.mxu0 0.0
    %238 = vmatpush1.msra.mxu0 0.0
    %239 = vmatprep.subr.mxu0 0.0
    %240 = vmatpush1.msra.mxu0 0.0
    %241 = vmatprep.subr.mxu0 0.0
    %242 = vmatpush1.msra.mxu0 0.0
    %243 = vmatprep.subr.mxu0 0.0
    %244 = vmatpush1.msra.mxu0 0.0
    %245 = vmatprep.subr.mxu0 0.0
    %246 = vmatpush1.msra.mxu0 0.0
    %247 = vmatprep.subr.mxu0 0.0
    %248 = vmatpush1.msra.mxu0 0.0
    %249 = vmatprep.subr.mxu0 0.0
    %250 = vmatpush1.msra.mxu0 0.0
    %251 = vmatprep.subr.mxu0 0.0
    %252 = vmatpush1.msra.mxu0 0.0
    %253 = vmatprep.subr.mxu0 0.0
    %254 = vmatpush1.msra.mxu0 0.0
    %255 = vmatprep.subr.mxu0 0.0
    %256 = vmatpush1.msra.mxu0 0.0
    %257 = vmatprep.subr.mxu0 0.0
    %258 = vmatpush1.msra.mxu0 0.0
    %259 = vmatprep.mubr.f32.mxu0 0.0
    %260 = vmatmul.mubr.f32.gmra.mrb[0].mxu0 %v194
    %v261 = vpop.f32.mrb[0].mxu0
    %v262 = vadd.f32 %v117, %v261
    %v263 = vpop.f32.mrb[0].mxu0
    %264 = vdwg.mxu0
    %265 = vst [vmem:[#allocation10] sm:$0x1] %v262
    %s266 = sld [smem:[#allocation2 + $0x1]]
    %s267 = scalar_lea.vmem [#allocation6], %s266
    %v268 = vld [vmem:[%s267] sm:$0x1]
    %269 = vmatprep.subr.mxu0 0.0
    %270 = vmatpush1.msra.mxu0 %v84
    %271 = vmatprep.subr.mxu0 0.0
    %272 = vmatpush1.msra.mxu0 %v85
    %273 = vmatprep.subr.mxu0 0.0
    %274 = vmatpush1.msra.mxu0 %v86
    %275 = vmatprep.subr.mxu0 0.0
    %276 = vmatpush1.msra.mxu0 %v87
    %277 = vmatprep.subr.mxu0 0.0
    %278 = vmatpush1.msra.mxu0 %v88
    %279 = vmatprep.subr.mxu0 0.0
    %280 = vmatpush1.msra.mxu0 %v89
    %281 = vmatprep.subr.mxu0 0.0
    %282 = vmatpush1.msra.mxu0 %v90
    %283 = vmatprep.subr.mxu0 0.0
    %284 = vmatpush1.msra.mxu0 %v91
    %285 = vmatprep.subr.mxu0 0.0
    %286 = vmatpush1.msra.mxu0 %v92
    %287 = vmatprep.subr.mxu0 0.0
    %288 = vmatpush1.msra.mxu0 %v93
    %289 = vmatprep.subr.mxu0 0.0
    %290 = vmatpush1.msra.mxu0 %v94
    %291 = vmatprep.subr.mxu0 0.0
    %292 = vmatpush1.msra.mxu0 %v95
    %293 = vmatprep.subr.mxu0 0.0
    %294 = vmatpush1.msra.mxu0 %v96
    %295 = vmatprep.subr.mxu0 0.0
    %296 = vmatpush1.msra.mxu0 %v97
    %297 = vmatprep.subr.mxu0 0.0
    %298 = vmatpush1.msra.mxu0 %v98
    %299 = vmatprep.subr.mxu0 0.0
    %300 = vmatpush1.msra.mxu0 %v99
    %301 = vmatprep.subr.mxu0 0.0
    %302 = vmatpush1.msra.mxu0 0.0
    %303 = vmatprep.subr.mxu0 0.0
    %304 = vmatpush1.msra.mxu0 0.0
    %305 = vmatprep.subr.mxu0 0.0
    %306 = vmatpush1.msra.mxu0 0.0
    %307 = vmatprep.subr.mxu0 0.0
    %308 = vmatpush1.msra.mxu0 0.0
    %309 = vmatprep.subr.mxu0 0.0
    %310 = vmatpush1.msra.mxu0 0.0
    %311 = vmatprep.subr.mxu0 0.0
    %312 = vmatpush1.msra.mxu0 0.0
    %313 = vmatprep.subr.mxu0 0.0
    %314 = vmatpush1.msra.mxu0 0.0
    %315 = vmatprep.subr.mxu0 0.0
    %316 = vmatpush1.msra.mxu0 0.0
    %317 = vmatprep.subr.mxu0 0.0
    %318 = vmatpush1.msra.mxu0 0.0
    %319 = vmatprep.subr.mxu0 0.0
    %320 = vmatpush1.msra.mxu0 0.0
    %321 = vmatprep.subr.mxu0 0.0
    %322 = vmatpush1.msra.mxu0 0.0
    %323 = vmatprep.subr.mxu0 0.0
    %324 = vmatpush1.msra.mxu0 0.0
    %325 = vmatprep.subr.mxu0 0.0
    %326 = vmatpush1.msra.mxu0 0.0
    %327 = vmatprep.subr.mxu0 0.0
    %328 = vmatpush1.msra.mxu0 0.0
    %329 = vmatprep.subr.mxu0 0.0
    %330 = vmatpush1.msra.mxu0 0.0
    %331 = vmatprep.subr.mxu0 0.0
    %332 = vmatpush1.msra.mxu0 0.0
    %333 = vmatprep.mubr.f32.mxu0 0.0
    %334 = vmatmul.mubr.f32.gmra.mrb[0].mxu0 %v194
    %v335 = vpop.f32.mrb[0].mxu0
    %v336 = vadd.f32 0.0, %v335
    %v337 = vpop.f32.mrb[0].mxu0
    %338 = vdwg.mxu0
    %v339 = vadd.f32 %v268, %v336
    %v340 = vadd.f32 %v339, %v116
    %v341 = vtanh.pop %v340
    %342 = vmatprep.subr.mxu0 0.0
    %343 = vmatpush1.msra.mxu0 %v100
    %344 = vmatprep.subr.mxu0 0.0
    %345 = vmatpush1.msra.mxu0 %v101
    %346 = vmatprep.subr.mxu0 0.0
    %347 = vmatpush1.msra.mxu0 %v102
    %348 = vmatprep.subr.mxu0 0.0
    %349 = vmatpush1.msra.mxu0 %v103
    %350 = vmatprep.subr.mxu0 0.0
    %351 = vmatpush1.msra.mxu0 %v104
    %352 = vmatprep.subr.mxu0 0.0
    %353 = vmatpush1.msra.mxu0 %v105
    %354 = vmatprep.subr.mxu0 0.0
    %355 = vmatpush1.msra.mxu0 %v106
    %356 = vmatprep.subr.mxu0 0.0
    %357 = vmatpush1.msra.mxu0 %v107
    %358 = vmatprep.subr.mxu0 0.0
    %359 = vmatpush1.msra.mxu0 %v108
    %360 = vmatprep.subr.mxu0 0.0
    %361 = vmatpush1.msra.mxu0 %v109
    %362 = vmatprep.subr.mxu0 0.0
    %363 = vmatpush1.msra.mxu0 %v110
    %364 = vmatprep.subr.mxu0 0.0
    %365 = vmatpush1.msra.mxu0 %v111
    %366 = vmatprep.subr.mxu0 0.0
    %367 = vmatpush1.msra.mxu0 %v112
    %368 = vmatprep.subr.mxu0 0.0
    %369 = vmatpush1.msra.mxu0 %v113
    %370 = vmatprep.subr.mxu0 0.0
    %371 = vmatpush1.msra.mxu0 %v114
    %372 = vmatprep.subr.mxu0 0.0
    %373 = vmatpush1.msra.mxu0 %v115
    %374 = vmatprep.subr.mxu0 0.0
    %375 = vmatpush1.msra.mxu0 0.0
    %376 = vmatprep.subr.mxu0 0.0
    %377 = vmatpush1.msra.mxu0 0.0
    %378 = vmatprep.subr.mxu0 0.0
    %379 = vmatpush1.msra.mxu0 0.0
    %380 = vmatprep.subr.mxu0 0.0
    %381 = vmatpush1.msra.mxu0 0.0
    %382 = vmatprep.subr.mxu0 0.0
    %383 = vmatpush1.msra.mxu0 0.0
    %384 = vmatprep.subr.mxu0 0.0
    %385 = vmatpush1.msra.mxu0 0.0
    %386 = vmatprep.subr.mxu0 0.0
    %387 = vmatpush1.msra.mxu0 0.0
    %388 = vmatprep.subr.mxu0 0.0
    %389 = vmatpush1.msra.mxu0 0.0
    %390 = vmatprep.subr.mxu0 0.0
    %391 = vmatpush1.msra.mxu0 0.0
    %392 = vmatprep.subr.mxu0 0.0
    %393 = vmatpush1.msra.mxu0 0.0
    %394 = vmatprep.subr.mxu0 0.0
    %395 = vmatpush1.msra.mxu0 0.0
    %396 = vmatprep.subr.mxu0 0.0
    %397 = vmatpush1.msra.mxu0 0.0
    %398 = vmatprep.subr.mxu0 0.0
    %399 = vmatpush1.msra.mxu0 0.0
    %400 = vmatprep.subr.mxu0 0.0
    %401 = vmatpush1.msra.mxu0 0.0
    %402 = vmatprep.subr.mxu0 0.0
    %403 = vmatpush1.msra.mxu0 0.0
    %404 = vmatprep.subr.mxu0 0.0
    %405 = vmatpush1.msra.mxu0 0.0
    %406 = vmatprep.mubr.f32.mxu0 0.0
    %407 = vmatmul.mubr.f32.gmra.mrb[0].mxu0 %v341
    %v408 = vpop.f32.mrb[0].mxu0
    %v409 = vadd.f32 %v117, %v408
    %v410 = vpop.f32.mrb[0].mxu0
    %411 = vdwg.mxu0
    %412 = vst [vmem:[#allocation10 + $0x1] sm:$0x1] %v409
    %s413 = sld [smem:[#allocation2 + $0x2]]
    %s414 = scalar_lea.vmem [#allocation6], %s413
    %v415 = vld [vmem:[%s414] sm:$0x1]
    %416 = vmatprep.subr.mxu0 0.0
    %417 = vmatpush1.msra.mxu0 %v84
    %418 = vmatprep.subr.mxu0 0.0
    %419 = vmatpush1.msra.mxu0 %v85
    %420 = vmatprep.subr.mxu0 0.0
    %421 = vmatpush1.msra.mxu0 %v86
    %422 = vmatprep.subr.mxu0 0.0
    %423 = vmatpush1.msra.mxu0 %v87
    %424 = vmatprep.subr.mxu0 0.0
    %425 = vmatpush1.msra.mxu0 %v88
    %426 = vmatprep.subr.mxu0 0.0
    %427 = vmatpush1.msra.mxu0 %v89
    %428 = vmatprep.subr.mxu0 0.0
    %429 = vmatpush1.msra.mxu0 %v90
    %430 = vmatprep.subr.mxu0 0.0
    %431 = vmatpush1.msra.mxu0 %v91
    %432 = vmatprep.subr.mxu0 0.0
    %433 = vmatpush1.msra.mxu0 %v92
    %434 = vmatprep.subr.mxu0 0.0
    %435 = vmatpush1.msra.mxu0 %v93
    %436 = vmatprep.subr.mxu0 0.0
    %437 = vmatpush1.msra.mxu0 %v94
    %438 = vmatprep.subr.mxu0 0.0
    %439 = vmatpush1.msra.mxu0 %v95
    %440 = vmatprep.subr.mxu0 0.0
    %441 = vmatpush1.msra.mxu0 %v96
    %442 = vmatprep.subr.mxu0 0.0
    %443 = vmatpush1.msra.mxu0 %v97
    %444 = vmatprep.subr.mxu0 0.0
    %445 = vmatpush1.msra.mxu0 %v98
    %446 = vmatprep.subr.mxu0 0.0
    %447 = vmatpush1.msra.mxu0 %v99
    %448 = vmatprep.subr.mxu0 0.0
    %449 = vmatpush1.msra.mxu0 0.0
    %450 = vmatprep.subr.mxu0 0.0
    %451 = vmatpush1.msra.mxu0 0.0
    %452 = vmatprep.subr.mxu0 0.0
    %453 = vmatpush1.msra.mxu0 0.0
    %454 = vmatprep.subr.mxu0 0.0
    %455 = vmatpush1.msra.mxu0 0.0
    %456 = vmatprep.subr.mxu0 0.0
    %457 = vmatpush1.msra.mxu0 0.0
    %458 = vmatprep.subr.mxu0 0.0
    %459 = vmatpush1.msra.mxu0 0.0
    %460 = vmatprep.subr.mxu0 0.0
    %461 = vmatpush1.msra.mxu0 0.0
    %462 = vmatprep.subr.mxu0 0.0
    %463 = vmatpush1.msra.mxu0 0.0
    %464 = vmatprep.subr.mxu0 0.0
    %465 = vmatpush1.msra.mxu0 0.0
    %466 = vmatprep.subr.mxu0 0.0
    %467 = vmatpush1.msra.mxu0 0.0
    %468 = vmatprep.subr.mxu0 0.0
    %469 = vmatpush1.msra.mxu0 0.0
    %470 = vmatprep.subr.mxu0 0.0
    %471 = vmatpush1.msra.mxu0 0.0
    %472 = vmatprep.subr.mxu0 0.0
    %473 = vmatpush1.msra.mxu0 0.0
    %474 = vmatprep.subr.mxu0 0.0
    %475 = vmatpush1.msra.mxu0 0.0
    %476 = vmatprep.subr.mxu0 0.0
    %477 = vmatpush1.msra.mxu0 0.0
    %478 = vmatprep.subr.mxu0 0.0
    %479 = vmatpush1.msra.mxu0 0.0
    %480 = vmatprep.mubr.f32.mxu0 0.0
    %481 = vmatmul.mubr.f32.gmra.mrb[0].mxu0 %v341
    %v482 = vpop.f32.mrb[0].mxu0
    %v483 = vadd.f32 0.0, %v482
    %v484 = vpop.f32.mrb[0].mxu0
    %485 = vdwg.mxu0
    %v486 = vadd.f32 %v415, %v483
    %v487 = vadd.f32 %v486, %v116
    %v488 = vtanh.pop %v487
    %489 = vmatprep.subr.mxu0 0.0
    %490 = vmatpush1.msra.mxu0 %v100
    %491 = vmatprep.subr.mxu0 0.0
    %492 = vmatpush1.msra.mxu0 %v101
    %493 = vmatprep.subr.mxu0 0.0
    %494 = vmatpush1.msra.mxu0 %v102
    %495 = vmatprep.subr.mxu0 0.0
    %496 = vmatpush1.msra.mxu0 %v103
    %497 = vmatprep.subr.mxu0 0.0
    %498 = vmatpush1.msra.mxu0 %v104
    %499 = vmatprep.subr.mxu0 0.0
    %500 = vmatpush1.msra.mxu0 %v105
    %501 = vmatprep.subr.mxu0 0.0
    %502 = vmatpush1.msra.mxu0 %v106
    %503 = vmatprep.subr.mxu0 0.0
    %504 = vmatpush1.msra.mxu0 %v107
    %505 = vmatprep.subr.mxu0 0.0
    %506 = vmatpush1.msra.mxu0 %v108
    %507 = vmatprep.subr.mxu0 0.0
    %508 = vmatpush1.msra.mxu0 %v109
    %509 = vmatprep.subr.mxu0 0.0
    %510 = vmatpush1.msra.mxu0 %v110
    %511 = vmatprep.subr.mxu0 0.0
    %512 = vmatpush1.msra.mxu0 %v111
    %513 = vmatprep.subr.mxu0 0.0
    %514 = vmatpush1.msra.mxu0 %v112
    %515 = vmatprep.subr.mxu0 0.0
    %516 = vmatpush1.msra.mxu0 %v113
    %517 = vmatprep.subr.mxu0 0.0
    %518 = vmatpush1.msra.mxu0 %v114
    %519 = vmatprep.subr.mxu0 0.0
    %520 = vmatpush1.msra.mxu0 %v115
    %521 = vmatprep.subr.mxu0 0.0
    %522 = vmatpush1.msra.mxu0 0.0
    %523 = vmatprep.subr.mxu0 0.0
    %524 = vmatpush1.msra.mxu0 0.0
    %525 = vmatprep.subr.mxu0 0.0
    %526 = vmatpush1.msra.mxu0 0.0
    %527 = vmatprep.subr.mxu0 0.0
    %528 = vmatpush1.msra.mxu0 0.0
    %529 = vmatprep.subr.mxu0 0.0
    %530 = vmatpush1.msra.mxu0 0.0
    %531 = vmatprep.subr.mxu0 0.0
    %532 = vmatpush1.msra.mxu0 0.0
    %533 = vmatprep.subr.mxu0 0.0
    %534 = vmatpush1.msra.mxu0 0.0
    %535 = vmatprep.subr.mxu0 0.0
    %536 = vmatpush1.msra.mxu0 0.0
    %537 = vmatprep.subr.mxu0 0.0
    %538 = vmatpush1.msra.mxu0 0.0
    %539 = vmatprep.subr.mxu0 0.0
    %540 = vmatpush1.msra.mxu0 0.0
    %541 = vmatprep.subr.mxu0 0.0
    %542 = vmatpush1.msra.mxu0 0.0
    %543 = vmatprep.subr.mxu0 0.0
    %544 = vmatpush1.msra.mxu0 0.0
    %545 = vmatprep.subr.mxu0 0.0
    %546 = vmatpush1.msra.mxu0 0.0
    %547 = vmatprep.subr.mxu0 0.0
    %548 = vmatpush1.msra.mxu0 0.0
    %549 = vmatprep.subr.mxu0 0.0
    %550 = vmatpush1.msra.mxu0 0.0
    %551 = vmatprep.subr.mxu0 0.0
    %552 = vmatpush1.msra.mxu0 0.0
    %553 = vmatprep.mubr.f32.mxu0 0.0
    %554 = vmatmul.mubr.f32.gmra.mrb[0].mxu0 %v488
    %v555 = vpop.f32.mrb[0].mxu0
    %v556 = vadd.f32 %v117, %v555
    %v557 = vpop.f32.mrb[0].mxu0
    %558 = vdwg.mxu0
    %559 = vst [vmem:[#allocation10 + $0x2] sm:$0x1] %v556
    %s560 = sld [smem:[#allocation2 + $0x3]]
    %s561 = scalar_lea.vmem [#allocation6], %s560
    %v562 = vld [vmem:[%s561] sm:$0x1]
    %563 = vmatprep.subr.mxu0 0.0
    %564 = vmatpush1.msra.mxu0 %v84
    %565 = vmatprep.subr.mxu0 0.0
    %566 = vmatpush1.msra.mxu0 %v85
    %567 = vmatprep.subr.mxu0 0.0
    %568 = vmatpush1.msra.mxu0 %v86
    %569 = vmatprep.subr.mxu0 0.0
    %570 = vmatpush1.msra.mxu0 %v87
    %571 = vmatprep.subr.mxu0 0.0
    %572 = vmatpush1.msra.mxu0 %v88
    %573 = vmatprep.subr.mxu0 0.0
    %574 = vmatpush1.msra.mxu0 %v89
    %575 = vmatprep.subr.mxu0 0.0
    %576 = vmatpush1.msra.mxu0 %v90
    %577 = vmatprep.subr.mxu0 0.0
    %578 = vmatpush1.msra.mxu0 %v91
    %579 = vmatprep.subr.mxu0 0.0
    %580 = vmatpush1.msra.mxu0 %v92
    %581 = vmatprep.subr.mxu0 0.0
    %582 = vmatpush1.msra.mxu0 %v93
    %583 = vmatprep.subr.mxu0 0.0
    %584 = vmatpush1.msra.mxu0 %v94
    %585 = vmatprep.subr.mxu0 0.0
    %586 = vmatpush1.msra.mxu0 %v95
    %587 = vmatprep.subr.mxu0 0.0
    %588 = vmatpush1.msra.mxu0 %v96
    %589 = vmatprep.subr.mxu0 0.0
    %590 = vmatpush1.msra.mxu0 %v97
    %591 = vmatprep.subr.mxu0 0.0
    %592 = vmatpush1.msra.mxu0 %v98
    %593 = vmatprep.subr.mxu0 0.0
    %594 = vmatpush1.msra.mxu0 %v99
    %595 = vmatprep.subr.mxu0 0.0
    %596 = vmatpush1.msra.mxu0 0.0
    %597 = vmatprep.subr.mxu0 0.0
    %598 = vmatpush1.msra.mxu0 0.0
    %599 = vmatprep.subr.mxu0 0.0
    %600 = vmatpush1.msra.mxu0 0.0
    %601 = vmatprep.subr.mxu0 0.0
    %602 = vmatpush1.msra.mxu0 0.0
    %603 = vmatprep.subr.mxu0 0.0
    %604 = vmatpush1.msra.mxu0 0.0
    %605 = vmatprep.subr.mxu0 0.0
    %606 = vmatpush1.msra.mxu0 0.0
    %607 = vmatprep.subr.mxu0 0.0
    %608 = vmatpush1.msra.mxu0 0.0
    %609 = vmatprep.subr.mxu0 0.0
    %610 = vmatpush1.msra.mxu0 0.0
    %611 = vmatprep.subr.mxu0 0.0
    %612 = vmatpush1.msra.mxu0 0.0
    %613 = vmatprep.subr.mxu0 0.0
    %614 = vmatpush1.msra.mxu0 0.0
    %615 = vmatprep.subr.mxu0 0.0
    %616 = vmatpush1.msra.mxu0 0.0
    %617 = vmatprep.subr.mxu0 0.0
    %618 = vmatpush1.msra.mxu0 0.0
    %619 = vmatprep.subr.mxu0 0.0
    %620 = vmatpush1.msra.mxu0 0.0
    %621 = vmatprep.subr.mxu0 0.0
    %622 = vmatpush1.msra.mxu0 0.0
    %623 = vmatprep.subr.mxu0 0.0
    %624 = vmatpush1.msra.mxu0 0.0
    %625 = vmatprep.subr.mxu0 0.0
    %626 = vmatpush1.msra.mxu0 0.0
    %627 = vmatprep.mubr.f32.mxu0 0.0
    %628 = vmatmul.mubr.f32.gmra.mrb[0].mxu0 %v488
    %v629 = vpop.f32.mrb[0].mxu0
    %v630 = vadd.f32 0.0, %v629
    %v631 = vpop.f32.mrb[0].mxu0
    %632 = vdwg.mxu0
    %v633 = vadd.f32 %v562, %v630
    %v634 = vadd.f32 %v633, %v116
    %v635 = vtanh.pop %v634
    %636 = vmatprep.subr.mxu0 0.0
    %637 = vmatpush1.msra.mxu0 %v100
    %638 = vmatprep.subr.mxu0 0.0
    %639 = vmatpush1.msra.mxu0 %v101
    %640 = vmatprep.subr.mxu0 0.0
    %641 = vmatpush1.msra.mxu0 %v102
    %642 = vmatprep.subr.mxu0 0.0
    %643 = vmatpush1.msra.mxu0 %v103
    %644 = vmatprep.subr.mxu0 0.0
    %645 = vmatpush1.msra.mxu0 %v104
    %646 = vmatprep.subr.mxu0 0.0
    %647 = vmatpush1.msra.mxu0 %v105
    %648 = vmatprep.subr.mxu0 0.0
    %649 = vmatpush1.msra.mxu0 %v106
    %650 = vmatprep.subr.mxu0 0.0
    %651 = vmatpush1.msra.mxu0 %v107
    %652 = vmatprep.subr.mxu0 0.0
    %653 = vmatpush1.msra.mxu0 %v108
    %654 = vmatprep.subr.mxu0 0.0
    %655 = vmatpush1.msra.mxu0 %v109
    %656 = vmatprep.subr.mxu0 0.0
    %657 = vmatpush1.msra.mxu0 %v110
    %658 = vmatprep.subr.mxu0 0.0
    %659 = vmatpush1.msra.mxu0 %v111
    %660 = vmatprep.subr.mxu0 0.0
    %661 = vmatpush1.msra.mxu0 %v112
    %662 = vmatprep.subr.mxu0 0.0
    %663 = vmatpush1.msra.mxu0 %v113
    %664 = vmatprep.subr.mxu0 0.0
    %665 = vmatpush1.msra.mxu0 %v114
    %666 = vmatprep.subr.mxu0 0.0
    %667 = vmatpush1.msra.mxu0 %v115
    %668 = vmatprep.subr.mxu0 0.0
    %669 = vmatpush1.msra.mxu0 0.0
    %670 = vmatprep.subr.mxu0 0.0
    %671 = vmatpush1.msra.mxu0 0.0
    %672 = vmatprep.subr.mxu0 0.0
    %673 = vmatpush1.msra.mxu0 0.0
    %674 = vmatprep.subr.mxu0 0.0
    %675 = vmatpush1.msra.mxu0 0.0
    %676 = vmatprep.subr.mxu0 0.0
    %677 = vmatpush1.msra.mxu0 0.0
    %678 = vmatprep.subr.mxu0 0.0
    %679 = vmatpush1.msra.mxu0 0.0
    %680 = vmatprep.subr.mxu0 0.0
    %681 = vmatpush1.msra.mxu0 0.0
    %682 = vmatprep.subr.mxu0 0.0
    %683 = vmatpush1.msra.mxu0 0.0
    %684 = vmatprep.subr.mxu0 0.0
    %685 = vmatpush1.msra.mxu0 0.0
    %686 = vmatprep.subr.mxu0 0.0
    %687 = vmatpush1.msra.mxu0 0.0
    %688 = vmatprep.subr.mxu0 0.0
    %689 = vmatpush1.msra.mxu0 0.0
    %690 = vmatprep.subr.mxu0 0.0
    %691 = vmatpush1.msra.mxu0 0.0
    %692 = vmatprep.subr.mxu0 0.0
    %693 = vmatpush1.msra.mxu0 0.0
    %694 = vmatprep.subr.mxu0 0.0
    %695 = vmatpush1.msra.mxu0 0.0
    %696 = vmatprep.subr.mxu0 0.0
    %697 = vmatpush1.msra.mxu0 0.0
    %698 = vmatprep.subr.mxu0 0.0
    %699 = vmatpush1.msra.mxu0 0.0
    %700 = vmatprep.mubr.f32.mxu0 0.0
    %701 = vmatmul.mubr.f32.gmra.mrb[0].mxu0 %v635
    %v702 = vpop.f32.mrb[0].mxu0
    %v703 = vadd.f32 %v117, %v702
    %v704 = vpop.f32.mrb[0].mxu0
    %705 = vdwg.mxu0
    %706 = vst [vmem:[#allocation10 + $0x3] sm:$0x1] %v703
    %s707 = sld [smem:[#allocation2 + $0x4]]
    %s708 = scalar_lea.vmem [#allocation6], %s707
    %v709 = vld [vmem:[%s708] sm:$0x1]
    %710 = vmatprep.subr.mxu0 0.0
    %711 = vmatpush1.msra.mxu0 %v84
    %712 = vmatprep.subr.mxu0 0.0
    %713 = vmatpush1.msra.mxu0 %v85
    %714 = vmatprep.subr.mxu0 0.0
    %715 = vmatpush1.msra.mxu0 %v86
    %716 = vmatprep.subr.mxu0 0.0
    %717 = vmatpush1.msra.mxu0 %v87
    %718 = vmatprep.subr.mxu0 0.0
    %719 = vmatpush1.msra.mxu0 %v88
    %720 = vmatprep.subr.mxu0 0.0
    %721 = vmatpush1.msra.mxu0 %v89
    %722 = vmatprep.subr.mxu0 0.0
    %723 = vmatpush1.msra.mxu0 %v90
    %724 = vmatprep.subr.mxu0 0.0
    %725 = vmatpush1.msra.mxu0 %v91
    %726 = vmatprep.subr.mxu0 0.0
    %727 = vmatpush1.msra.mxu0 %v92
    %728 = vmatprep.subr.mxu0 0.0
    %729 = vmatpush1.msra.mxu0 %v93
    %730 = vmatprep.subr.mxu0 0.0
    %731 = vmatpush1.msra.mxu0 %v94
    %732 = vmatprep.subr.mxu0 0.0
    %733 = vmatpush1.msra.mxu0 %v95
    %734 = vmatprep.subr.mxu0 0.0
    %735 = vmatpush1.msra.mxu0 %v96
    %736 = vmatprep.subr.mxu0 0.0
    %737 = vmatpush1.msra.mxu0 %v97
    %738 = vmatprep.subr.mxu0 0.0
    %739 = vmatpush1.msra.mxu0 %v98
    %740 = vmatprep.subr.mxu0 0.0
    %741 = vmatpush1.msra.mxu0 %v99
    %742 = vmatprep.subr.mxu0 0.0
    %743 = vmatpush1.msra.mxu0 0.0
    %744 = vmatprep.subr.mxu0 0.0
    %745 = vmatpush1.msra.mxu0 0.0
    %746 = vmatprep.subr.mxu0 0.0
    %747 = vmatpush1.msra.mxu0 0.0
    %748 = vmatprep.subr.mxu0 0.0
    %749 = vmatpush1.msra.mxu0 0.0
    %750 = vmatprep.subr.mxu0 0.0
    %751 = vmatpush1.msra.mxu0 0.0
    %752 = vmatprep.subr.mxu0 0.0
    %753 = vmatpush1.msra.mxu0 0.0
    %754 = vmatprep.subr.mxu0 0.0
    %755 = vmatpush1.msra.mxu0 0.0
    %756 = vmatprep.subr.mxu0 0.0
    %757 = vmatpush1.msra.mxu0 0.0
    %758 = vmatprep.subr.mxu0 0.0
    %759 = vmatpush1.msra.mxu0 0.0
    %760 = vmatprep.subr.mxu0 0.0
    %761 = vmatpush1.msra.mxu0 0.0
    %762 = vmatprep.subr.mxu0 0.0
    %763 = vmatpush1.msra.mxu0 0.0
    %764 = vmatprep.subr.mxu0 0.0
    %765 = vmatpush1.msra.mxu0 0.0
    %766 = vmatprep.subr.mxu0 0.0
    %767 = vmatpush1.msra.mxu0 0.0
    %768 = vmatprep.subr.mxu0 0.0
    %769 = vmatpush1.msra.mxu0 0.0
    %770 = vmatprep.subr.mxu0 0.0
    %771 = vmatpush1.msra.mxu0 0.0
    %772 = vmatprep.subr.mxu0 0.0
    %773 = vmatpush1.msra.mxu0 0.0
    %774 = vmatprep.mubr.f32.mxu0 0.0
    %775 = vmatmul.mubr.f32.gmra.mrb[0].mxu0 %v635
    %v776 = vpop.f32.mrb[0].mxu0
    %v777 = vadd.f32 0.0, %v776
    %v778 = vpop.f32.mrb[0].mxu0
    %779 = vdwg.mxu0
    %v780 = vadd.f32 %v709, %v777
    %v781 = vadd.f32 %v780, %v116
    %v782 = vtanh.pop %v781
    %783 = vmatprep.subr.mxu0 0.0
    %784 = vmatpush1.msra.mxu0 %v100
    %785 = vmatprep.subr.mxu0 0.0
    %786 = vmatpush1.msra.mxu0 %v101
    %787 = vmatprep.subr.mxu0 0.0
    %788 = vmatpush1.msra.mxu0 %v102
    %789 = vmatprep.subr.mxu0 0.0
    %790 = vmatpush1.msra.mxu0 %v103
    %791 = vmatprep.subr.mxu0 0.0
    %792 = vmatpush1.msra.mxu0 %v104
    %793 = vmatprep.subr.mxu0 0.0
    %794 = vmatpush1.msra.mxu0 %v105
    %795 = vmatprep.subr.mxu0 0.0
    %796 = vmatpush1.msra.mxu0 %v106
    %797 = vmatprep.subr.mxu0 0.0
    %798 = vmatpush1.msra.mxu0 %v107
    %799 = vmatprep.subr.mxu0 0.0
    %800 = vmatpush1.msra.mxu0 %v108
    %801 = vmatprep.subr.mxu0 0.0
    %802 = vmatpush1.msra.mxu0 %v109
    %803 = vmatprep.subr.mxu0 0.0
    %804 = vmatpush1.msra.mxu0 %v110
    %805 = vmatprep.subr.mxu0 0.0
    %806 = vmatpush1.msra.mxu0 %v111
    %807 = vmatprep.subr.mxu0 0.0
    %808 = vmatpush1.msra.mxu0 %v112
    %809 = vmatprep.subr.mxu0 0.0
    %810 = vmatpush1.msra.mxu0 %v113
    %811 = vmatprep.subr.mxu0 0.0
    %812 = vmatpush1.msra.mxu0 %v114
    %813 = vmatprep.subr.mxu0 0.0
    %814 = vmatpush1.msra.mxu0 %v115
    %815 = vmatprep.subr.mxu0 0.0
    %816 = vmatpush1.msra.mxu0 0.0
    %817 = vmatprep.subr.mxu0 0.0
    %818 = vmatpush1.msra.mxu0 0.0
    %819 = vmatprep.subr.mxu0 0.0
    %820 = vmatpush1.msra.mxu0 0.0
    %821 = vmatprep.subr.mxu0 0.0
    %822 = vmatpush1.msra.mxu0 0.0
    %823 = vmatprep.subr.mxu0 0.0
    %824 = vmatpush1.msra.mxu0 0.0
    %825 = vmatprep.subr.mxu0 0.0
    %826 = vmatpush1.msra.mxu0 0.0
    %827 = vmatprep.subr.mxu0 0.0
    %828 = vmatpush1.msra.mxu0 0.0
    %829 = vmatprep.subr.mxu0 0.0
    %830 = vmatpush1.msra.mxu0 0.0
    %831 = vmatprep.subr.mxu0 0.0
    %832 = vmatpush1.msra.mxu0 0.0
    %833 = vmatprep.subr.mxu0 0.0
    %834 = vmatpush1.msra.mxu0 0.0
    %835 = vmatprep.subr.mxu0 0.0
    %836 = vmatpush1.msra.mxu0 0.0
    %837 = vmatprep.subr.mxu0 0.0
    %838 = vmatpush1.msra.mxu0 0.0
    %839 = vmatprep.subr.mxu0 0.0
    %840 = vmatpush1.msra.mxu0 0.0
    %841 = vmatprep.subr.mxu0 0.0
    %842 = vmatpush1.msra.mxu0 0.0
    %843 = vmatprep.subr.mxu0 0.0
    %844 = vmatpush1.msra.mxu0 0.0
    %845 = vmatprep.subr.mxu0 0.0
    %846 = vmatpush1.msra.mxu0 0.0
    %847 = vmatprep.mubr.f32.mxu0 0.0
    %848 = vmatmul.mubr.f32.gmra.mrb[0].mxu0 %v782
    %v849 = vpop.f32.mrb[0].mxu0
    %v850 = vadd.f32 %v117, %v849
    %v851 = vpop.f32.mrb[0].mxu0
    %852 = vdwg.mxu0
    %853 = vst [vmem:[#allocation10 + $0x4] sm:$0x1] %v850
    %s854 = sld [smem:[#allocation2 + $0x5]]
    %s855 = scalar_lea.vmem [#allocation6], %s854
    %v856 = vld [vmem:[%s855] sm:$0x1]
    %857 = vmatprep.subr.mxu0 0.0
    %858 = vmatpush1.msra.mxu0 %v84
    %859 = vmatprep.subr.mxu0 0.0
    %860 = vmatpush1.msra.mxu0 %v85
    %861 = vmatprep.subr.mxu0 0.0
    %862 = vmatpush1.msra.mxu0 %v86
    %863 = vmatprep.subr.mxu0 0.0
    %864 = vmatpush1.msra.mxu0 %v87
    %865 = vmatprep.subr.mxu0 0.0
    %866 = vmatpush1.msra.mxu0 %v88
    %867 = vmatprep.subr.mxu0 0.0
    %868 = vmatpush1.msra.mxu0 %v89
    %869 = vmatprep.subr.mxu0 0.0
    %870 = vmatpush1.msra.mxu0 %v90
    %871 = vmatprep.subr.mxu0 0.0
    %872 = vmatpush1.msra.mxu0 %v91
    %873 = vmatprep.subr.mxu0 0.0
    %874 = vmatpush1.msra.mxu0 %v92
    %875 = vmatprep.subr.mxu0 0.0
    %876 = vmatpush1.msra.mxu0 %v93
    %877 = vmatprep.subr.mxu0 0.0
    %878 = vmatpush1.msra.mxu0 %v94
    %879 = vmatprep.subr.mxu0 0.0
    %880 = vmatpush1.msra.mxu0 %v95
    %881 = vmatprep.subr.mxu0 0.0
    %882 = vmatpush1.msra.mxu0 %v96
    %883 = vmatprep.subr.mxu0 0.0
    %884 = vmatpush1.msra.mxu0 %v97
    %885 = vmatprep.subr.mxu0 0.0
    %886 = vmatpush1.msra.mxu0 %v98
    %887 = vmatprep.subr.mxu0 0.0
    %888 = vmatpush1.msra.mxu0 %v99
    %889 = vmatprep.subr.mxu0 0.0
    %890 = vmatpush1.msra.mxu0 0.0
    %891 = vmatprep.subr.mxu0 0.0
    %892 = vmatpush1.msra.mxu0 0.0
    %893 = vmatprep.subr.mxu0 0.0
    %894 = vmatpush1.msra.mxu0 0.0
    %895 = vmatprep.subr.mxu0 0.0
    %896 = vmatpush1.msra.mxu0 0.0
    %897 = vmatprep.subr.mxu0 0.0
    %898 = vmatpush1.msra.mxu0 0.0
    %899 = vmatprep.subr.mxu0 0.0
    %900 = vmatpush1.msra.mxu0 0.0
    %901 = vmatprep.subr.mxu0 0.0
    %902 = vmatpush1.msra.mxu0 0.0
    %903 = vmatprep.subr.mxu0 0.0
    %904 = vmatpush1.msra.mxu0 0.0
    %905 = vmatprep.subr.mxu0 0.0
    %906 = vmatpush1.msra.mxu0 0.0
    %907 = vmatprep.subr.mxu0 0.0
    %908 = vmatpush1.msra.mxu0 0.0
    %909 = vmatprep.subr.mxu0 0.0
    %910 = vmatpush1.msra.mxu0 0.0
    %911 = vmatprep.subr.mxu0 0.0
    %912 = vmatpush1.msra.mxu0 0.0
    %913 = vmatprep.subr.mxu0 0.0
    %914 = vmatpush1.msra.mxu0 0.0
    %915 = vmatprep.subr.mxu0 0.0
    %916 = vmatpush1.msra.mxu0 0.0
    %917 = vmatprep.subr.mxu0 0.0
    %918 = vmatpush1.msra.mxu0 0.0
    %919 = vmatprep.subr.mxu0 0.0
    %920 = vmatpush1.msra.mxu0 0.0
    %921 = vmatprep.mubr.f32.mxu0 0.0
    %922 = vmatmul.mubr.f32.gmra.mrb[0].mxu0 %v782
    %v923 = vpop.f32.mrb[0].mxu0
    %v924 = vadd.f32 0.0, %v923
    %v925 = vpop.f32.mrb[0].mxu0
    %926 = vdwg.mxu0
    %v927 = vadd.f32 %v856, %v924
    %v928 = vadd.f32 %v927, %v116
    %v929 = vtanh.pop %v928
    %930 = vmatprep.subr.mxu0 0.0
    %931 = vmatpush1.msra.mxu0 %v100
    %932 = vmatprep.subr.mxu0 0.0
    %933 = vmatpush1.msra.mxu0 %v101
    %934 = vmatprep.subr.mxu0 0.0
    %935 = vmatpush1.msra.mxu0 %v102
    %936 = vmatprep.subr.mxu0 0.0
    %937 = vmatpush1.msra.mxu0 %v103
    %938 = vmatprep.subr.mxu0 0.0
    %939 = vmatpush1.msra.mxu0 %v104
    %940 = vmatprep.subr.mxu0 0.0
    %941 = vmatpush1.msra.mxu0 %v105
    %942 = vmatprep.subr.mxu0 0.0
    %943 = vmatpush1.msra.mxu0 %v106
    %944 = vmatprep.subr.mxu0 0.0
    %945 = vmatpush1.msra.mxu0 %v107
    %946 = vmatprep.subr.mxu0 0.0
    %947 = vmatpush1.msra.mxu0 %v108
    %948 = vmatprep.subr.mxu0 0.0
    %949 = vmatpush1.msra.mxu0 %v109
    %950 = vmatprep.subr.mxu0 0.0
    %951 = vmatpush1.msra.mxu0 %v110
    %952 = vmatprep.subr.mxu0 0.0
    %953 = vmatpush1.msra.mxu0 %v111
    %954 = vmatprep.subr.mxu0 0.0
    %955 = vmatpush1.msra.mxu0 %v112
    %956 = vmatprep.subr.mxu0 0.0
    %957 = vmatpush1.msra.mxu0 %v113
    %958 = vmatprep.subr.mxu0 0.0
    %959 = vmatpush1.msra.mxu0 %v114
    %960 = vmatprep.subr.mxu0 0.0
    %961 = vmatpush1.msra.mxu0 %v115
    %962 = vmatprep.subr.mxu0 0.0
    %963 = vmatpush1.msra.mxu0 0.0
    %964 = vmatprep.subr.mxu0 0.0
    %965 = vmatpush1.msra.mxu0 0.0
    %966 = vmatprep.subr.mxu0 0.0
    %967 = vmatpush1.msra.mxu0 0.0
    %968 = vmatprep.subr.mxu0 0.0
    %969 = vmatpush1.msra.mxu0 0.0
    %970 = vmatprep.subr.mxu0 0.0
    %971 = vmatpush1.msra.mxu0 0.0
    %972 = vmatprep.subr.mxu0 0.0
    %973 = vmatpush1.msra.mxu0 0.0
    %974 = vmatprep.subr.mxu0 0.0
    %975 = vmatpush1.msra.mxu0 0.0
    %976 = vmatprep.subr.mxu0 0.0
    %977 = vmatpush1.msra.mxu0 0.0
    %978 = vmatprep.subr.mxu0 0.0
    %979 = vmatpush1.msra.mxu0 0.0
    %980 = vmatprep.subr.mxu0 0.0
    %981 = vmatpush1.msra.mxu0 0.0
    %982 = vmatprep.subr.mxu0 0.0
    %983 = vmatpush1.msra.mxu0 0.0
    %984 = vmatprep.subr.mxu0 0.0
    %985 = vmatpush1.msra.mxu0 0.0
    %986 = vmatprep.subr.mxu0 0.0
    %987 = vmatpush1.msra.mxu0 0.0
    %988 = vmatprep.subr.mxu0 0.0
    %989 = vmatpush1.msra.mxu0 0.0
    %990 = vmatprep.subr.mxu0 0.0
    %991 = vmatpush1.msra.mxu0 0.0
    %992 = vmatprep.subr.mxu0 0.0
    %993 = vmatpush1.msra.mxu0 0.0
    %994 = vmatprep.mubr.f32.mxu0 0.0
    %995 = vmatmul.mubr.f32.gmra.mrb[0].mxu0 %v929
    %v996 = vpop.f32.mrb[0].mxu0
    %v997 = vadd.f32 %v117, %v996
    %v998 = vpop.f32.mrb[0].mxu0
    %999 = vdwg.mxu0
    %1000 = vst [vmem:[#allocation10 + $0x5] sm:$0x1] %v997
    %s1001 = sld [smem:[#allocation2 + $0x6]]
    %s1002 = scalar_lea.vmem [#allocation6], %s1001
    %v1003 = vld [vmem:[%s1002] sm:$0x1]
    %1004 = vmatprep.subr.mxu0 0.0
    %1005 = vmatpush1.msra.mxu0 %v84
    %1006 = vmatprep.subr.mxu0 0.0
    %1007 = vmatpush1.msra.mxu0 %v85
    %1008 = vmatprep.subr.mxu0 0.0
    %1009 = vmatpush1.msra.mxu0 %v86
    %1010 = vmatprep.subr.mxu0 0.0
    %1011 = vmatpush1.msra.mxu0 %v87
    %1012 = vmatprep.subr.mxu0 0.0
    %1013 = vmatpush1.msra.mxu0 %v88
    %1014 = vmatprep.subr.mxu0 0.0
    %1015 = vmatpush1.msra.mxu0 %v89
    %1016 = vmatprep.subr.mxu0 0.0
    %1017 = vmatpush1.msra.mxu0 %v90
    %1018 = vmatprep.subr.mxu0 0.0
    %1019 = vmatpush1.msra.mxu0 %v91
    %1020 = vmatprep.subr.mxu0 0.0
    %1021 = vmatpush1.msra.mxu0 %v92
    %1022 = vmatprep.subr.mxu0 0.0
    %1023 = vmatpush1.msra.mxu0 %v93
    %1024 = vmatprep.subr.mxu0 0.0
    %1025 = vmatpush1.msra.mxu0 %v94
    %1026 = vmatprep.subr.mxu0 0.0
    %1027 = vmatpush1.msra.mxu0 %v95
    %1028 = vmatprep.subr.mxu0 0.0
    %1029 = vmatpush1.msra.mxu0 %v96
    %1030 = vmatprep.subr.mxu0 0.0
    %1031 = vmatpush1.msra.mxu0 %v97
    %1032 = vmatprep.subr.mxu0 0.0
    %1033 = vmatpush1.msra.mxu0 %v98
    %1034 = vmatprep.subr.mxu0 0.0
    %1035 = vmatpush1.msra.mxu0 %v99
    %1036 = vmatprep.subr.mxu0 0.0
    %1037 = vmatpush1.msra.mxu0 0.0
    %1038 = vmatprep.subr.mxu0 0.0
    %1039 = vmatpush1.msra.mxu0 0.0
    %1040 = vmatprep.subr.mxu0 0.0
    %1041 = vmatpush1.msra.mxu0 0.0
    %1042 = vmatprep.subr.mxu0 0.0
    %1043 = vmatpush1.msra.mxu0 0.0
    %1044 = vmatprep.subr.mxu0 0.0
    %1045 = vmatpush1.msra.mxu0 0.0
    %1046 = vmatprep.subr.mxu0 0.0
    %1047 = vmatpush1.msra.mxu0 0.0
    %1048 = vmatprep.subr.mxu0 0.0
    %1049 = vmatpush1.msra.mxu0 0.0
    %1050 = vmatprep.subr.mxu0 0.0
    %1051 = vmatpush1.msra.mxu0 0.0
    %1052 = vmatprep.subr.mxu0 0.0
    %1053 = vmatpush1.msra.mxu0 0.0
    %1054 = vmatprep.subr.mxu0 0.0
    %1055 = vmatpush1.msra.mxu0 0.0
    %1056 = vmatprep.subr.mxu0 0.0
    %1057 = vmatpush1.msra.mxu0 0.0
    %1058 = vmatprep.subr.mxu0 0.0
    %1059 = vmatpush1.msra.mxu0 0.0
    %1060 = vmatprep.subr.mxu0 0.0
    %1061 = vmatpush1.msra.mxu0 0.0
    %1062 = vmatprep.subr.mxu0 0.0
    %1063 = vmatpush1.msra.mxu0 0.0
    %1064 = vmatprep.subr.mxu0 0.0
    %1065 = vmatpush1.msra.mxu0 0.0
    %1066 = vmatprep.subr.mxu0 0.0
    %1067 = vmatpush1.msra.mxu0 0.0
    %1068 = vmatprep.mubr.f32.mxu0 0.0
    %1069 = vmatmul.mubr.f32.gmra.mrb[0].mxu0 %v929
    %v1070 = vpop.f32.mrb[0].mxu0
    %v1071 = vadd.f32 0.0, %v1070
    %v1072 = vpop.f32.mrb[0].mxu0
    %1073 = vdwg.mxu0
    %v1074 = vadd.f32 %v1003, %v1071
    %v1075 = vadd.f32 %v1074, %v116
    %v1076 = vtanh.pop %v1075
    %1077 = vmatprep.subr.mxu0 0.0
    %1078 = vmatpush1.msra.mxu0 %v100
    %1079 = vmatprep.subr.mxu0 0.0
    %1080 = vmatpush1.msra.mxu0 %v101
    %1081 = vmatprep.subr.mxu0 0.0
    %1082 = vmatpush1.msra.mxu0 %v102
    %1083 = vmatprep.subr.mxu0 0.0
    %1084 = vmatpush1.msra.mxu0 %v103
    %1085 = vmatprep.subr.mxu0 0.0
    %1086 = vmatpush1.msra.mxu0 %v104
    %1087 = vmatprep.subr.mxu0 0.0
    %1088 = vmatpush1.msra.mxu0 %v105
    %1089 = vmatprep.subr.mxu0 0.0
    %1090 = vmatpush1.msra.mxu0 %v106
    %1091 = vmatprep.subr.mxu0 0.0
    %1092 = vmatpush1.msra.mxu0 %v107
    %1093 = vmatprep.subr.mxu0 0.0
    %1094 = vmatpush1.msra.mxu0 %v108
    %1095 = vmatprep.subr.mxu0 0.0
    %1096 = vmatpush1.msra.mxu0 %v109
    %1097 = vmatprep.subr.mxu0 0.0
    %1098 = vmatpush1.msra.mxu0 %v110
    %1099 = vmatprep.subr.mxu0 0.0
    %1100 = vmatpush1.msra.mxu0 %v111
    %1101 = vmatprep.subr.mxu0 0.0
    %1102 = vmatpush1.msra.mxu0 %v112
    %1103 = vmatprep.subr.mxu0 0.0
    %1104 = vmatpush1.msra.mxu0 %v113
    %1105 = vmatprep.subr.mxu0 0.0
    %1106 = vmatpush1.msra.mxu0 %v114
    %1107 = vmatprep.subr.mxu0 0.0
    %1108 = vmatpush1.msra.mxu0 %v115
    %1109 = vmatprep.subr.mxu0 0.0
    %1110 = vmatpush1.msra.mxu0 0.0
    %1111 = vmatprep.subr.mxu0 0.0
    %1112 = vmatpush1.msra.mxu0 0.0
    %1113 = vmatprep.subr.mxu0 0.0
    %1114 = vmatpush1.msra.mxu0 0.0
    %1115 = vmatprep.subr.mxu0 0.0
    %1116 = vmatpush1.msra.mxu0 0.0
    %1117 = vmatprep.subr.mxu0 0.0
    %1118 = vmatpush1.msra.mxu0 0.0
    %1119 = vmatprep.subr.mxu0 0.0
    %1120 = vmatpush1.msra.mxu0 0.0
    %1121 = vmatprep.subr.mxu0 0.0
    %1122 = vmatpush1.msra.mxu0 0.0
    %1123 = vmatprep.subr.mxu0 0.0
    %1124 = vmatpush1.msra.mxu0 0.0
    %1125 = vmatprep.subr.mxu0 0.0
    %1126 = vmatpush1.msra.mxu0 0.0
    %1127 = vmatprep.subr.mxu0 0.0
    %1128 = vmatpush1.msra.mxu0 0.0
    %1129 = vmatprep.subr.mxu0 0.0
    %1130 = vmatpush1.msra.mxu0 0.0
    %1131 = vmatprep.subr.mxu0 0.0
    %1132 = vmatpush1.msra.mxu0 0.0
    %1133 = vmatprep.subr.mxu0 0.0
    %1134 = vmatpush1.msra.mxu0 0.0
    %1135 = vmatprep.subr.mxu0 0.0
    %1136 = vmatpush1.msra.mxu0 0.0
    %1137 = vmatprep.subr.mxu0 0.0
    %1138 = vmatpush1.msra.mxu0 0.0
    %1139 = vmatprep.subr.mxu0 0.0
    %1140 = vmatpush1.msra.mxu0 0.0
    %1141 = vmatprep.mubr.f32.mxu0 0.0
    %1142 = vmatmul.mubr.f32.gmra.mrb[0].mxu0 %v1076
    %v1143 = vpop.f32.mrb[0].mxu0
    %v1144 = vadd.f32 %v117, %v1143
    %v1145 = vpop.f32.mrb[0].mxu0
    %1146 = vdwg.mxu0
    %1147 = vst [vmem:[#allocation10 + $0x6] sm:$0x1] %v1144
    %s1148 = sld [smem:[#allocation2 + $0x7]]
    %s1149 = scalar_lea.vmem [#allocation6], %s1148
    %v1150 = vld [vmem:[%s1149] sm:$0x1]
    %1151 = vmatprep.subr.mxu0 0.0
    %1152 = vmatpush1.msra.mxu0 %v84
    %1153 = vmatprep.subr.mxu0 0.0
    %1154 = vmatpush1.msra.mxu0 %v85
    %1155 = vmatprep.subr.mxu0 0.0
    %1156 = vmatpush1.msra.mxu0 %v86
    %1157 = vmatprep.subr.mxu0 0.0
    %1158 = vmatpush1.msra.mxu0 %v87
    %1159 = vmatprep.subr.mxu0 0.0
    %1160 = vmatpush1.msra.mxu0 %v88
    %1161 = vmatprep.subr.mxu0 0.0
    %1162 = vmatpush1.msra.mxu0 %v89
    %1163 = vmatprep.subr.mxu0 0.0
    %1164 = vmatpush1.msra.mxu0 %v90
    %1165 = vmatprep.subr.mxu0 0.0
    %1166 = vmatpush1.msra.mxu0 %v91
    %1167 = vmatprep.subr.mxu0 0.0
    %1168 = vmatpush1.msra.mxu0 %v92
    %1169 = vmatprep.subr.mxu0 0.0
    %1170 = vmatpush1.msra.mxu0 %v93
    %1171 = vmatprep.subr.mxu0 0.0
    %1172 = vmatpush1.msra.mxu0 %v94
    %1173 = vmatprep.subr.mxu0 0.0
    %1174 = vmatpush1.msra.mxu0 %v95
    %1175 = vmatprep.subr.mxu0 0.0
    %1176 = vmatpush1.msra.mxu0 %v96
    %1177 = vmatprep.subr.mxu0 0.0
    %1178 = vmatpush1.msra.mxu0 %v97
    %1179 = vmatprep.subr.mxu0 0.0
    %1180 = vmatpush1.msra.mxu0 %v98
    %1181 = vmatprep.subr.mxu0 0.0
    %1182 = vmatpush1.msra.mxu0 %v99
    %1183 = vmatprep.subr.mxu0 0.0
    %1184 = vmatpush1.msra.mxu0 0.0
    %1185 = vmatprep.subr.mxu0 0.0
    %1186 = vmatpush1.msra.mxu0 0.0
    %1187 = vmatprep.subr.mxu0 0.0
    %1188 = vmatpush1.msra.mxu0 0.0
    %1189 = vmatprep.subr.mxu0 0.0
    %1190 = vmatpush1.msra.mxu0 0.0
    %1191 = vmatprep.subr.mxu0 0.0
    %1192 = vmatpush1.msra.mxu0 0.0
    %1193 = vmatprep.subr.mxu0 0.0
    %1194 = vmatpush1.msra.mxu0 0.0
    %1195 = vmatprep.subr.mxu0 0.0
    %1196 = vmatpush1.msra.mxu0 0.0
    %1197 = vmatprep.subr.mxu0 0.0
    %1198 = vmatpush1.msra.mxu0 0.0
    %1199 = vmatprep.subr.mxu0 0.0
    %1200 = vmatpush1.msra.mxu0 0.0
    %1201 = vmatprep.subr.mxu0 0.0
    %1202 = vmatpush1.msra.mxu0 0.0
    %1203 = vmatprep.subr.mxu0 0.0
    %1204 = vmatpush1.msra.mxu0 0.0
    %1205 = vmatprep.subr.mxu0 0.0
    %1206 = vmatpush1.msra.mxu0 0.0
    %1207 = vmatprep.subr.mxu0 0.0
    %1208 = vmatpush1.msra.mxu0 0.0
    %1209 = vmatprep.subr.mxu0 0.0
    %1210 = vmatpush1.msra.mxu0 0.0
    %1211 = vmatprep.subr.mxu0 0.0
    %1212 = vmatpush1.msra.mxu0 0.0
    %1213 = vmatprep.subr.mxu0 0.0
    %1214 = vmatpush1.msra.mxu0 0.0
    %1215 = vmatprep.mubr.f32.mxu0 0.0
    %1216 = vmatmul.mubr.f32.gmra.mrb[0].mxu0 %v1076
    %v1217 = vpop.f32.mrb[0].mxu0
    %v1218 = vadd.f32 0.0, %v1217
    %v1219 = vpop.f32.mrb[0].mxu0
    %1220 = vdwg.mxu0
    %v1221 = vadd.f32 %v1150, %v1218
    %v1222 = vadd.f32 %v1221, %v116
    %v1223 = vtanh.pop %v1222
    %1224 = vmatprep.subr.mxu0 0.0
    %1225 = vmatpush1.msra.mxu0 %v100
    %1226 = vmatprep.subr.mxu0 0.0
    %1227 = vmatpush1.msra.mxu0 %v101
    %1228 = vmatprep.subr.mxu0 0.0
    %1229 = vmatpush1.msra.mxu0 %v102
    %1230 = vmatprep.subr.mxu0 0.0
    %1231 = vmatpush1.msra.mxu0 %v103
    %1232 = vmatprep.subr.mxu0 0.0
    %1233 = vmatpush1.msra.mxu0 %v104
    %1234 = vmatprep.subr.mxu0 0.0
    %1235 = vmatpush1.msra.mxu0 %v105
    %1236 = vmatprep.subr.mxu0 0.0
    %1237 = vmatpush1.msra.mxu0 %v106
    %1238 = vmatprep.subr.mxu0 0.0
    %1239 = vmatpush1.msra.mxu0 %v107
    %1240 = vmatprep.subr.mxu0 0.0
    %1241 = vmatpush1.msra.mxu0 %v108
    %1242 = vmatprep.subr.mxu0 0.0
    %1243 = vmatpush1.msra.mxu0 %v109
    %1244 = vmatprep.subr.mxu0 0.0
    %1245 = vmatpush1.msra.mxu0 %v110
    %1246 = vmatprep.subr.mxu0 0.0
    %1247 = vmatpush1.msra.mxu0 %v111
    %1248 = vmatprep.subr.mxu0 0.0
    %1249 = vmatpush1.msra.mxu0 %v112
    %1250 = vmatprep.subr.mxu0 0.0
    %1251 = vmatpush1.msra.mxu0 %v113
    %1252 = vmatprep.subr.mxu0 0.0
    %1253 = vmatpush1.msra.mxu0 %v114
    %1254 = vmatprep.subr.mxu0 0.0
    %1255 = vmatpush1.msra.mxu0 %v115
    %1256 = vmatprep.subr.mxu0 0.0
    %1257 = vmatpush1.msra.mxu0 0.0
    %1258 = vmatprep.subr.mxu0 0.0
    %1259 = vmatpush1.msra.mxu0 0.0
    %1260 = vmatprep.subr.mxu0 0.0
    %1261 = vmatpush1.msra.mxu0 0.0
    %1262 = vmatprep.subr.mxu0 0.0
    %1263 = vmatpush1.msra.mxu0 0.0
    %1264 = vmatprep.subr.mxu0 0.0
    %1265 = vmatpush1.msra.mxu0 0.0
    %1266 = vmatprep.subr.mxu0 0.0
    %1267 = vmatpush1.msra.mxu0 0.0
    %1268 = vmatprep.subr.mxu0 0.0
    %1269 = vmatpush1.msra.mxu0 0.0
    %1270 = vmatprep.subr.mxu0 0.0
    %1271 = vmatpush1.msra.mxu0 0.0
    %1272 = vmatprep.subr.mxu0 0.0
    %1273 = vmatpush1.msra.mxu0 0.0
    %1274 = vmatprep.subr.mxu0 0.0
    %1275 = vmatpush1.msra.mxu0 0.0
    %1276 = vmatprep.subr.mxu0 0.0
    %1277 = vmatpush1.msra.mxu0 0.0
    %1278 = vmatprep.subr.mxu0 0.0
    %1279 = vmatpush1.msra.mxu0 0.0
    %1280 = vmatprep.subr.mxu0 0.0
    %1281 = vmatpush1.msra.mxu0 0.0
    %1282 = vmatprep.subr.mxu0 0.0
    %1283 = vmatpush1.msra.mxu0 0.0
    %1284 = vmatprep.subr.mxu0 0.0
    %1285 = vmatpush1.msra.mxu0 0.0
    %1286 = vmatprep.subr.mxu0 0.0
    %1287 = vmatpush1.msra.mxu0 0.0
    %1288 = vmatprep.mubr.f32.mxu0 0.0
    %1289 = vmatmul.mubr.f32.gmra.mrb[0].mxu0 %v1223
    %v1290 = vpop.f32.mrb[0].mxu0
    %v1291 = vadd.f32 %v117, %v1290
    %v1292 = vpop.f32.mrb[0].mxu0
    %1293 = vdwg.mxu0
    %1294 = vst [vmem:[#allocation10 + $0x7] sm:$0x1] %v1291
    %1295 = vst [vmem:[#allocation11] sm:$0x1] %v1223
    // Predicated region
    $region46: #{rnn_forward_seq.1} parent=1 // pred_check
      _
    $region47: #{rnn_forward_seq.1} parent=1 // pred_check_branch
      %1297 = sbr.rel (0) target = $region49
    $region48: #{rnn_forward_seq.1} parent=1 // pred_region
      %s1299 = ssub.s32 128, 128
      %1300 = vsyncadd [#allocation4], %s1299
      %s1302 = sshll.u32 [#allocation10], 4
      %s1303 = int_to_ptr.vmem [resolvable:$true] %s1302
      %1305 = dma.vmem_to_hbm [thread:$0]  %s1303, 128, %s7, [#allocation4]
    $region49: #{rnn_forward_seq.1} parent=1 // pred_fallthru
      _
    // Predicated region
    $region50: #{rnn_forward_seq.1} parent=1 // pred_check
      _
    $region51: #{rnn_forward_seq.1} parent=1 // pred_check_branch
      %1307 = sbr.rel (0) target = $region53
    $region52: #{rnn_forward_seq.1} parent=1 // pred_region
      %s1309 = ssub.s32 16, 16
      %1310 = vsyncadd [#allocation12], %s1309
      %s1312 = sshll.u32 [#allocation11], 4
      %s1313 = int_to_ptr.vmem [resolvable:$true] %s1312
      %1315 = dma.vmem_to_hbm [thread:$0]  %s1313, 16, %s8, [#allocation12]
    $region53: #{rnn_forward_seq.1} parent=1 // pred_fallthru
      _
    // Predicated region
    $region54: #{rnn_forward_seq.1} parent=1 // pred_check
      _
    $region55: #{rnn_forward_seq.1} parent=1 // pred_check_branch
      %1317 = sbr.rel (0) target = $region57
    $region56: #{rnn_forward_seq.1} parent=1 // pred_region
      %1318 = dma.done [#allocation4], 128
    $region57: #{rnn_forward_seq.1} parent=1 // pred_fallthru
      _
    // Predicated region
    $region58: #{rnn_forward_seq.1} parent=1 // pred_check
      _
    $region59: #{rnn_forward_seq.1} parent=1 // pred_check_branch
      %1320 = sbr.rel (0) target = $region61
    $region60: #{rnn_forward_seq.1} parent=1 // pred_region
      %1321 = dma.done [#allocation12], 16
    $region61: #{rnn_forward_seq.1} parent=1 // pred_fallthru
      _
    %1322 = vsyncpa [#allocation3], 1
    %1323 = vsyncpa [#allocation8], 1
    %1324 = vsyncpa [#allocation4], 1
    %1325 = vsyncpa [#allocation12], 1
    %1326 = vsyncpa [#allocation5], 1

</llo_original>
